<compile_context>
chip_gen: v7x
topology: tpu7x:2x2x1
jax: 0.10.0
libtpu: 0.0.40
codegen_flags: <defaults>
</compile_context>

<pallas_src>
import functools

import jax
import jax.numpy as jnp
from jax.experimental import pallas as pl
from jax.experimental.pallas import tpu as pltpu


# ----------------------------------------------------------------------------
# Fused kernel: conv0 -> LeakyReLU -> (concat) -> conv1 -> LeakyReLU
#               -> conv2 (1x1) -> sigmoid, all VMEM-resident.
#
# Column m = n*Ho*Wo + oi*Wo + oj indexes a conv1 output position.
#   p0t  (1024, TM)  conv0 im2col patches, one 64-row block per conv1 tap
#   w0bd (64, 1024)  block-diagonal conv0 weights = kron(I16, W0^T)
#   mask (64, TM)    0 for taps falling in conv1's pad=1 halo, else 1
#   p1xt (64, TM)    x-channel half of conv1's im2col patches
#   w1x/w1s (64,64)  conv1 weights for the x / conv0 channel halves
#   w2   (64, 1)     conv2 1x1 weights (column vector)
# ----------------------------------------------------------------------------
def _disc_fused_kernel(p0t_ref, w0bd_ref, b0_ref, mask_ref, p1xt_ref,
                       w1x_ref, w1s_ref, b1_ref, w2_ref, b2_ref, y_ref):
    # conv0 evaluated for every tap of every conv1 window: one MXU pass.
    s = jnp.dot(w0bd_ref[...], p0t_ref[...],
                preferred_element_type=jnp.float32)            # (64, TM) f32
    s = s + b0_ref[...]
    s = jnp.where(s >= 0.0, s, 0.01 * s)                       # LeakyReLU(0.01)
    s = s * mask_ref[...]                                      # zero the pad halo

    # conv1 = W1s @ s + W1x @ p1x + b1  (bf16 MXU operands, f32 accumulation)
    h = jnp.dot(w1s_ref[...], s.astype(jnp.bfloat16),
                preferred_element_type=jnp.float32)
    h = h + jnp.dot(w1x_ref[...], p1xt_ref[...],
                    preferred_element_type=jnp.float32)
    h = h + b1_ref[...]
    h = jnp.where(h >= 0.0, h, 0.01 * h)                       # LeakyReLU(0.01)

    # conv2 (64 -> 1): VPU multiply + sublane reduction; 64-channel
    # intermediate never leaves registers; output row is lane-dense.
    z = jnp.sum(h * w2_ref[...], axis=0, keepdims=True) + b2_ref[0]  # (1, TM)
    y_ref[...] = jax.nn.sigmoid(z).astype(y_ref.dtype)


def _fused_pallas(p0t, w0bd, b0t, mask, p1xt, w1x, w1s, b1c, w2c, b2, tm=128):
    K0, M = p0t.shape                     # K0 = 16 taps * 64 conv0-patch elems
    tm = min(tm, M)
    grid = (pl.cdiv(M, tm),)
    return pl.pallas_call(
        _disc_fused_kernel,
        out_shape=jax.ShapeDtypeStruct((1, M), jnp.float32),
        grid=grid,
        in_specs=[
            pl.BlockSpec((K0, tm), lambda i: (0, i)),          # p0t
            pl.BlockSpec((64, K0), lambda i: (0, 0)),          # w0bd
            pl.BlockSpec((64, 1), lambda i: (0, 0)),           # b0
            pl.BlockSpec((64, tm), lambda i: (0, i)),          # mask
            pl.BlockSpec((64, tm), lambda i: (0, i)),          # p1xt
            pl.BlockSpec((64, 64), lambda i: (0, 0)),          # w1x
            pl.BlockSpec((64, 64), lambda i: (0, 0)),          # w1s
            pl.BlockSpec((64, 1), lambda i: (0, 0)),           # b1
            pl.BlockSpec((64, 1), lambda i: (0, 0)),           # w2
            pl.BlockSpec(memory_space=pltpu.MemorySpace.SMEM), # b2 scalar
        ],
        out_specs=pl.BlockSpec((1, tm), lambda i: (0, i)),
        compiler_params=pltpu.CompilerParams(
            dimension_semantics=("parallel",)),
    )(p0t, w0bd, b0t, mask, p1xt, w1x, w1s, b1c, w2c, b2)


# ----------------------------------------------------------------------------
# Discriminator forward (host side = layout prep only)
# ----------------------------------------------------------------------------
@functools.partial(jax.jit, static_argnames=("patch_size",))
def discriminator_forward(x, source, params, patch_size: int = 2):
    f32, bf16 = jnp.float32, jnp.bfloat16
    N, Cx, H, W = x.shape
    Hs, Ws = source.shape[2], source.shape[3]

    # conv0: k=4, s=2, p=17 ; conv1: k=4, s=2, p=1
    H0 = (Hs + 2 * 17 - 4) // 2 + 1
    W0 = (Ws + 2 * 17 - 4) // 2 + 1
    assert (H0, W0) == (H, W), "x spatial must match conv0(source) spatial"
    Ho = (H + 2 - 4) // 2 + 1
    Wo = (W + 2 - 4) // 2 + 1
    M = N * Ho * Wo

    # ---- conv0 im2col in spatial NHWC form (tiny, pure layout) -------------
    src = jnp.transpose(source, (0, 2, 3, 1)).astype(f32)        # (N,Hs,Ws,4)
    sp = jnp.pad(src, ((0, 0), (17, 17), (17, 17), (0, 0)))
    p0_sp = jnp.stack(
        [sp[:, ai:ai + 2 * H0:2, aj:aj + 2 * W0:2, :]
         for ai in range(4) for aj in range(4)], axis=3)          # (N,H0,W0,16,4)
    p0_sp = p0_sp.reshape(N, H0, W0, 64)                          # k0=(ai,aj,ci)

    # ---- gather per conv1-window tap (pad=1, stride=2, k=4) ----------------
    p0_pad = jnp.pad(p0_sp, ((0, 0), (1, 1), (1, 1), (0, 0)))     # (N,H+2,W+2,64)
    x_pad = jnp.pad(jnp.transpose(x, (0, 2, 3, 1)).astype(f32),
                    ((0, 0), (1, 1), (1, 1), (0, 0)))             # (N,H+2,W+2,4)
    valid = jnp.pad(jnp.ones((N, H, W, 1), f32),
                    ((0, 0), (1, 1), (1, 1), (0, 0)))             # (N,H+2,W+2,1)

    def _tap(arr, ki, kj):   # -> (C, M), columns ordered (n, oi, oj)
        sl = arr[:, ki:ki + 2 * Ho:2, kj:kj + 2 * Wo:2, :]
        return jnp.transpose(sl, (3, 0, 1, 2)).reshape(arr.shape[-1], M)

    taps = [(ki, kj) for ki in range(4) for kj in range(4)]
    p0t = jnp.concatenate([_tap(p0_pad, *t) for t in taps], axis=0)   # (1024, M)
    p1xt = jnp.concatenate([_tap(x_pad, *t) for t in taps], axis=0)   # (64, M)
    mask = jnp.repeat(
        jnp.concatenate([_tap(valid, *t) for t in taps], axis=0),
        4, axis=0)                                                     # (64, M)

    # ---- weights in GEMM-transposed layout ---------------------------------
    w0t = jnp.transpose(params["w0"], (0, 2, 3, 1)).reshape(4, 64).astype(f32)
    w0bd = jnp.kron(jnp.eye(16, dtype=f32), w0t)                        # (64,1024)
    w1x = jnp.transpose(params["w1"][:, :4], (0, 2, 3, 1)).reshape(64, 64)
    w1s = jnp.transpose(params["w1"][:, 4:], (0, 2, 3, 1)).reshape(64, 64)
    b0t = jnp.tile(params["b0"].astype(f32), 16).reshape(64, 1)
    b1c = params["b1"].astype(f32).reshape(64, 1)
    w2c = params["w2"].astype(f32).reshape(64, 1)
    b2 = params["b2"].astype(f32).reshape(1)

    # ---- single fused pallas_call ------------------------------------------
    y = _fused_pallas(p0t.astype(bf16), w0bd.astype(bf16), b0t,
                      mask, p1xt.astype(bf16),
                      w1x.astype(bf16), w1s.astype(bf16),
                      b1c, w2c, b2)                                    # (1, M)

    # ---- unfold(2,p,p).unfold(3,p,p).permute(2,3,0,1,4,5).reshape(-1,1,p,p)
    p = patch_size
    nH, nW = Ho // p, Wo // p
    ysp = y.reshape(N, 1, Ho, Wo)
    ysp = ysp[:, :, : nH * p, : nW * p]
    ysp = ysp.reshape(N, 1, nH, p, nW, p).transpose(0, 1, 2, 4, 3, 5)
    return ysp.transpose(2, 3, 0, 1, 4, 5).reshape(-1, 1, p, p)


# ----------------------------------------------------------------------------
# Plain-JAX reference (lax conv, HIGHEST precision) for verification
# ----------------------------------------------------------------------------
def _ref_forward(x, source, params, patch_size: int = 2):
    def conv(v, w, b, stride, pad):
        out = jax.lax.conv_general_dilated(
            v, w, window_strides=(stride, stride),
            padding=((pad, pad), (pad, pad)),
            dimension_numbers=("NCHW", "OIHW", "NCHW"),
            precision=jax.lax.Precision.HIGHEST)
        return out + b.reshape(1, -1, 1, 1)

    lrelu = lambda v: jnp.where(v >= 0.0, v, 0.01 * v)
    s = lrelu(conv(source, params["w0"], params["b0"], 2, 17))
    h = lrelu(conv(jnp.concatenate([x, s], axis=1), params["w1"], params["b1"], 2, 1))
    y = jax.nn.sigmoid(conv(h, params["w2"], params["b2"], 1, 0))
    N, C, Hc, Wc = y.shape
    p = patch_size
    nH, nW = Hc // p, Wc // p
    y = y[:, :, : nH * p, : nW * p]
    y = y.reshape(N, C, nH, p, nW, p).transpose(0, 1, 2, 4, 3, 5)
    return y.transpose(2, 3, 0, 1, 4, 5).reshape(-1, 1, p, p)


def init_params(key):
    k0w, k0b, k1w, k1b, k2w, k2b = jax.random.split(key, 6)
    return {
        # conv0: Conv2d(4, 4, kernel_size=4)
        "w0": jax.random.normal(k0w, (4, 4, 4, 4), jnp.float32) * 0.1,
        "b0": jax.random.normal(k0b, (4,), jnp.float32) * 0.1,
        # conv1: Conv2d(8, 64, kernel_size=4)
        "w1": jax.random.normal(k1w, (64, 8, 4, 4), jnp.float32) * 0.05,
        "b1": jax.random.normal(k1b, (64,), jnp.float32) * 0.05,
        # conv2: Conv2d(64, 1, kernel_size=1)
        "w2": jax.random.normal(k2w, (1, 64, 1, 1), jnp.float32) * 0.1,
        "b2": jax.random.normal(k2b, (1,), jnp.float32) * 0.1,
    }


if __name__ == "__main__":
    key = jax.random.PRNGKey(0)
    kp, kx, ks = jax.random.split(key, 3)
    params = init_params(kp)

    # source: (2,4,2,2) -> conv0 out spatial = (2 + 2*17 - 4)//2 + 1 = 17
    # x must match conv0's output spatially for the channel concat: (2,4,17,17)
    source = jax.random.normal(ks, (2, 4, 2, 2), jnp.float32)
    x = jax.random.normal(kx, (2, 4, 17, 17), jnp.float32)

    out = discriminator_forward(x, source, params, patch_size=2)
    out = jax.block_until_ready(out)

    # conv1 out: 8x8 -> 4x4 grid of 2x2 patches over N=2 batch -> (32, 1, 2, 2)
    assert out.shape == (32, 1, 2, 2), out.shape
    assert bool(jnp.all((out >= 0.0) & (out <= 1.0)))  # sigmoid range sanity

    ref = _ref_forward(x, source, params, patch_size=2)
    max_err = float(jnp.max(jnp.abs(out - ref)))
    assert max_err < 2e-2, f"max abs err vs lax reference: {max_err}"

    print("KERNEL_OK")
</pallas_src>

<mosaic_0001>
module attributes {stable_mosaic.version = 11 : i64} {
  func.func @_disc_fused_kernel(%arg0: i32, %arg1: memref<1024x128xbf16, #tpu.memory_space<vmem>>, %arg2: memref<64x1024xbf16, #tpu.memory_space<vmem>>, %arg3: memref<64x1xf32, #tpu.memory_space<vmem>>, %arg4: memref<64x128xf32, #tpu.memory_space<vmem>>, %arg5: memref<64x128xbf16, #tpu.memory_space<vmem>>, %arg6: memref<64x64xbf16, #tpu.memory_space<vmem>>, %arg7: memref<64x64xbf16, #tpu.memory_space<vmem>>, %arg8: memref<64x1xf32, #tpu.memory_space<vmem>>, %arg9: memref<64x1xf32, #tpu.memory_space<vmem>>, %arg10: memref<1xf32, #tpu.memory_space<smem>>, %arg11: memref<1x128xf32, #tpu.memory_space<vmem>>) attributes {dimension_semantics = [#tpu.dimension_semantics<parallel>], iteration_bounds = array<i64: 1>, scalar_prefetch = 0 : i64, scratch_operands = 0 : i64, tpu.core_type = #tpu.core_type<tc>, window_params = [{transform_indices = @transform_0, window_bounds = array<i64: 1024, 128>}, {pipeline_mode = #tpu.pipeline_mode<synchronous>, transform_indices = @transform_1, window_bounds = array<i64: 64, 1024>}, {pipeline_mode = #tpu.pipeline_mode<synchronous>, transform_indices = @transform_2, window_bounds = array<i64: 64, 1>}, {transform_indices = @transform_3, window_bounds = array<i64: 64, 128>}, {transform_indices = @transform_4, window_bounds = array<i64: 64, 128>}, {pipeline_mode = #tpu.pipeline_mode<synchronous>, transform_indices = @transform_5, window_bounds = array<i64: 64, 64>}, {pipeline_mode = #tpu.pipeline_mode<synchronous>, transform_indices = @transform_6, window_bounds = array<i64: 64, 64>}, {pipeline_mode = #tpu.pipeline_mode<synchronous>, transform_indices = @transform_7, window_bounds = array<i64: 64, 1>}, {pipeline_mode = #tpu.pipeline_mode<synchronous>, transform_indices = @transform_8, window_bounds = array<i64: 64, 1>}, {transform_indices = @transform_9, window_bounds = array<i64: 1>}, {transform_indices = @transform_10, window_bounds = array<i64: 1, 128>}]} {
    %c0 = arith.constant 0 : index
    %c0_0 = arith.constant 0 : index
    %0 = vector.load %arg2[%c0, %c0_0] : memref<64x1024xbf16, #tpu.memory_space<vmem>>, vector<64x1024xbf16>
    %c0_1 = arith.constant 0 : index
    %c0_2 = arith.constant 0 : index
    %1 = vector.load %arg1[%c0_1, %c0_2] : memref<1024x128xbf16, #tpu.memory_space<vmem>>, vector<1024x128xbf16>
    %cst = arith.constant dense<0.000000e+00> : vector<64x128xf32>
    %2 = tpu.matmul %0, %1, %cst {dimension_numbers = #tpu.dot_dimension_numbers<[1], [0], [0], [1], [0, 0, 1, 1], [], []>} : vector<64x1024xbf16>, vector<1024x128xbf16>, vector<64x128xf32> -> vector<64x128xf32>
    %c0_3 = arith.constant 0 : index
    %c0_4 = arith.constant 0 : index
    %3 = vector.load %arg3[%c0_3, %c0_4] : memref<64x1xf32, #tpu.memory_space<vmem>>, vector<64x1xf32>
    %4 = vector.broadcast %3 : vector<64x1xf32> to vector<64x128xf32>
    %5 = arith.addf %2, %4 : vector<64x128xf32>
    %cst_5 = arith.constant 0.000000e+00 : f32
    %6 = vector.broadcast %cst_5 : f32 to vector<64x128xf32>
    %7 = arith.cmpf oge, %5, %6 : vector<64x128xf32>
    %cst_6 = arith.constant 0.00999999977 : f32
    %8 = vector.broadcast %cst_6 : f32 to vector<64x128xf32>
    %9 = arith.mulf %8, %5 : vector<64x128xf32>
    %10 = arith.select %7, %5, %9 : vector<64x128xi1>, vector<64x128xf32>
    %c0_7 = arith.constant 0 : index
    %c0_8 = arith.constant 0 : index
    %11 = vector.load %arg4[%c0_7, %c0_8] : memref<64x128xf32, #tpu.memory_space<vmem>>, vector<64x128xf32>
    %12 = arith.mulf %10, %11 : vector<64x128xf32>
    %c0_9 = arith.constant 0 : index
    %c0_10 = arith.constant 0 : index
    %13 = vector.load %arg7[%c0_9, %c0_10] : memref<64x64xbf16, #tpu.memory_space<vmem>>, vector<64x64xbf16>
    %14 = arith.truncf %12 : vector<64x128xf32> to vector<64x128xbf16>
    %cst_11 = arith.constant dense<0.000000e+00> : vector<64x128xf32>
    %15 = tpu.matmul %13, %14, %cst_11 {dimension_numbers = #tpu.dot_dimension_numbers<[1], [0], [0], [1], [0, 0, 1, 1], [], []>} : vector<64x64xbf16>, vector<64x128xbf16>, vector<64x128xf32> -> vector<64x128xf32>
    %c0_12 = arith.constant 0 : index
    %c0_13 = arith.constant 0 : index
    %16 = vector.load %arg6[%c0_12, %c0_13] : memref<64x64xbf16, #tpu.memory_space<vmem>>, vector<64x64xbf16>
    %c0_14 = arith.constant 0 : index
    %c0_15 = arith.constant 0 : index
    %17 = vector.load %arg5[%c0_14, %c0_15] : memref<64x128xbf16, #tpu.memory_space<vmem>>, vector<64x128xbf16>
    %cst_16 = arith.constant dense<0.000000e+00> : vector<64x128xf32>
    %18 = tpu.matmul %16, %17, %cst_16 {dimension_numbers = #tpu.dot_dimension_numbers<[1], [0], [0], [1], [0, 0, 1, 1], [], []>} : vector<64x64xbf16>, vector<64x128xbf16>, vector<64x128xf32> -> vector<64x128xf32>
    %19 = arith.addf %15, %18 : vector<64x128xf32>
    %c0_17 = arith.constant 0 : index
    %c0_18 = arith.constant 0 : index
    %20 = vector.load %arg8[%c0_17, %c0_18] : memref<64x1xf32, #tpu.memory_space<vmem>>, vector<64x1xf32>
    %21 = vector.broadcast %20 : vector<64x1xf32> to vector<64x128xf32>
    %22 = arith.addf %19, %21 : vector<64x128xf32>
    %cst_19 = arith.constant 0.000000e+00 : f32
    %23 = vector.broadcast %cst_19 : f32 to vector<64x128xf32>
    %24 = arith.cmpf oge, %22, %23 : vector<64x128xf32>
    %cst_20 = arith.constant 0.00999999977 : f32
    %25 = vector.broadcast %cst_20 : f32 to vector<64x128xf32>
    %26 = arith.mulf %25, %22 : vector<64x128xf32>
    %27 = arith.select %24, %22, %26 : vector<64x128xi1>, vector<64x128xf32>
    %c0_21 = arith.constant 0 : index
    %c0_22 = arith.constant 0 : index
    %28 = vector.load %arg9[%c0_21, %c0_22] : memref<64x1xf32, #tpu.memory_space<vmem>>, vector<64x1xf32>
    %29 = vector.broadcast %28 : vector<64x1xf32> to vector<64x128xf32>
    %30 = arith.mulf %27, %29 : vector<64x128xf32>
    %cst_23 = arith.constant dense<0.000000e+00> : vector<128xf32>
    %31 = vector.multi_reduction <add>, %30, %cst_23 [0] : vector<64x128xf32> to vector<128xf32>
    %32 = vector.shape_cast %31 : vector<128xf32> to vector<1x128xf32>
    %c0_24 = arith.constant 0 : index
    %33 = memref.load %arg10[%c0_24] : memref<1xf32, #tpu.memory_space<smem>>
    %34 = vector.broadcast %33 : f32 to vector<1x128xf32>
    %35 = arith.addf %32, %34 : vector<1x128xf32>
    %36 = arith.negf %35 : vector<1x128xf32>
    %37 = math.exp %36 : vector<1x128xf32>
    %cst_25 = arith.constant 1.000000e+00 : f32
    %38 = vector.broadcast %cst_25 : f32 to vector<1x128xf32>
    %39 = arith.addf %38, %37 : vector<1x128xf32>
    %40 = arith.divf %38, %39 : vector<1x128xf32>
    %c0_26 = arith.constant 0 : index
    %c0_27 = arith.constant 0 : index
    %41 = vector.load %arg11[%c0_26, %c0_27] : memref<1x128xf32, #tpu.memory_space<vmem>>, vector<1x128xf32>
    tpu.vector_store %arg11[%c0_26, %c0_27], %40 {strides = array<i32>} : memref<1x128xf32, #tpu.memory_space<vmem>>, vector<1x128xf32>,
    return
  }
  func.func @transform_0(%arg0: i32) -> (i32, i32) {
    %c0_i32 = arith.constant 0 : i32
    %c0_i32_0 = arith.constant 0 : i32
    return %c0_i32, %arg0 : i32, i32
  }
  func.func @transform_1(%arg0: i32) -> (i32, i32) {
    %c0_i32 = arith.constant 0 : i32
    %c0_i32_0 = arith.constant 0 : i32
    %c0_i32_1 = arith.constant 0 : i32
    return %c0_i32, %c0_i32_0 : i32, i32
  }
  func.func @transform_2(%arg0: i32) -> (i32, i32) {
    %c0_i32 = arith.constant 0 : i32
    %c0_i32_0 = arith.constant 0 : i32
    %c0_i32_1 = arith.constant 0 : i32
    return %c0_i32, %c0_i32_0 : i32, i32
  }
  func.func @transform_3(%arg0: i32) -> (i32, i32) {
    %c0_i32 = arith.constant 0 : i32
    %c0_i32_0 = arith.constant 0 : i32
    return %c0_i32, %arg0 : i32, i32
  }
  func.func @transform_4(%arg0: i32) -> (i32, i32) {
    %c0_i32 = arith.constant 0 : i32
    %c0_i32_0 = arith.constant 0 : i32
    return %c0_i32, %arg0 : i32, i32
  }
  func.func @transform_5(%arg0: i32) -> (i32, i32) {
    %c0_i32 = arith.constant 0 : i32
    %c0_i32_0 = arith.constant 0 : i32
    %c0_i32_1 = arith.constant 0 : i32
    return %c0_i32, %c0_i32_0 : i32, i32
  }
  func.func @transform_6(%arg0: i32) -> (i32, i32) {
    %c0_i32 = arith.constant 0 : i32
    %c0_i32_0 = arith.constant 0 : i32
    %c0_i32_1 = arith.constant 0 : i32
    return %c0_i32, %c0_i32_0 : i32, i32
  }
  func.func @transform_7(%arg0: i32) -> (i32, i32) {
    %c0_i32 = arith.constant 0 : i32
    %c0_i32_0 = arith.constant 0 : i32
    %c0_i32_1 = arith.constant 0 : i32
    return %c0_i32, %c0_i32_0 : i32, i32
  }
  func.func @transform_8(%arg0: i32) -> (i32, i32) {
    %c0_i32 = arith.constant 0 : i32
    %c0_i32_0 = arith.constant 0 : i32
    %c0_i32_1 = arith.constant 0 : i32
    return %c0_i32, %c0_i32_0 : i32, i32
  }
  func.func @transform_9(%arg0: i32) -> i32 {
    %c0_i32 = arith.constant 0 : i32
    %c0_i32_0 = arith.constant 0 : i32
    return %c0_i32 : i32
  }
  func.func @transform_10(%arg0: i32) -> (i32, i32) {
    %c0_i32 = arith.constant 0 : i32
    %c0_i32_0 = arith.constant 0 : i32
    return %c0_i32, %arg0 : i32, i32
  }
}

</mosaic_0001>

<llo_original>
// kernel: mul.4
$region0: #{mul.4}
  %s0 = inlined_call_operand.vmem [shape: f32[4,4,4,4], index: 0, kind: input, shape index: {}]
  %s1 = inlined_call_operand.vmem [shape: f32[4,64], index: 1, kind: output, shape index: {}]
  $region1: #{mul.4} parent=0
    #allocation0 [shape = 'u8[4096]{0}', space=vmem, size = 0x1000, scoped, tag = 'scoped mem for output reshape']
    #allocation1 [shape = 'u8[65536]{0}', space=vmem, size = 0x10000, scoped, tag = 'scoped mem for input reshape']
    %s3 = sshllo.u32 0, 4
    %s4 = smul.addr 4, 15
    %s5 = scalar_lea.vmem %s0, %s4
    %v6 = vld [vmem:[%s5] sm:%s3]
    %s7 = scalar_lea.vmem [#allocation1], 120
    %8 = vst [vmem:[%s7] sm:%s3] %v6
    %s9 = smul.addr 4, 14
    %s10 = scalar_lea.vmem %s0, %s9
    %v11 = vld [vmem:[%s10] sm:%s3]
    %s12 = scalar_lea.vmem [#allocation1], 112
    %13 = vst [vmem:[%s12] sm:%s3] %v11
    %s14 = smul.addr 4, 13
    %s15 = scalar_lea.vmem %s0, %s14
    %v16 = vld [vmem:[%s15] sm:%s3]
    %s17 = scalar_lea.vmem [#allocation1], 104
    %18 = vst [vmem:[%s17] sm:%s3] %v16
    %s19 = smul.addr 4, 12
    %s20 = scalar_lea.vmem %s0, %s19
    %v21 = vld [vmem:[%s20] sm:%s3]
    %s22 = scalar_lea.vmem [#allocation1], 96
    %23 = vst [vmem:[%s22] sm:%s3] %v21
    %s24 = smul.addr 4, 11
    %s25 = scalar_lea.vmem %s0, %s24
    %v26 = vld [vmem:[%s25] sm:%s3]
    %s27 = scalar_lea.vmem [#allocation1], 88
    %28 = vst [vmem:[%s27] sm:%s3] %v26
    %s29 = smul.addr 4, 10
    %s30 = scalar_lea.vmem %s0, %s29
    %v31 = vld [vmem:[%s30] sm:%s3]
    %s32 = scalar_lea.vmem [#allocation1], 80
    %33 = vst [vmem:[%s32] sm:%s3] %v31
    %s34 = smul.addr 4, 9
    %s35 = scalar_lea.vmem %s0, %s34
    %v36 = vld [vmem:[%s35] sm:%s3]
    %s37 = scalar_lea.vmem [#allocation1], 72
    %38 = vst [vmem:[%s37] sm:%s3] %v36
    %s39 = smul.addr 4, 8
    %s40 = scalar_lea.vmem %s0, %s39
    %v41 = vld [vmem:[%s40] sm:%s3]
    %s42 = scalar_lea.vmem [#allocation1], 64
    %43 = vst [vmem:[%s42] sm:%s3] %v41
    %s44 = smul.addr 4, 7
    %s45 = scalar_lea.vmem %s0, %s44
    %v46 = vld [vmem:[%s45] sm:%s3]
    %s47 = scalar_lea.vmem [#allocation1], 56
    %48 = vst [vmem:[%s47] sm:%s3] %v46
    %s49 = smul.addr 4, 6
    %s50 = scalar_lea.vmem %s0, %s49
    %v51 = vld [vmem:[%s50] sm:%s3]
    %s52 = scalar_lea.vmem [#allocation1], 48
    %53 = vst [vmem:[%s52] sm:%s3] %v51
    %s54 = smul.addr 4, 5
    %s55 = scalar_lea.vmem %s0, %s54
    %v56 = vld [vmem:[%s55] sm:%s3]
    %s57 = scalar_lea.vmem [#allocation1], 40
    %58 = vst [vmem:[%s57] sm:%s3] %v56
    %s59 = smul.addr 4, 4
    %s60 = scalar_lea.vmem %s0, %s59
    %v61 = vld [vmem:[%s60] sm:%s3]
    %s62 = scalar_lea.vmem [#allocation1], 32
    %63 = vst [vmem:[%s62] sm:%s3] %v61
    %s64 = smul.addr 4, 3
    %s65 = scalar_lea.vmem %s0, %s64
    %v66 = vld [vmem:[%s65] sm:%s3]
    %s67 = scalar_lea.vmem [#allocation1], 24
    %68 = vst [vmem:[%s67] sm:%s3] %v66
    %s69 = smul.addr 4, 2
    %s70 = scalar_lea.vmem %s0, %s69
    %v71 = vld [vmem:[%s70] sm:%s3]
    %s72 = scalar_lea.vmem [#allocation1], 16
    %73 = vst [vmem:[%s72] sm:%s3] %v71
    %s74 = scalar_lea.vmem %s0, 4
    %v75 = vld [vmem:[%s74] sm:%s3]
    %s76 = scalar_lea.vmem [#allocation1], 8
    %77 = vst [vmem:[%s76] sm:%s3] %v75
    %v78 = vld [vmem:[%s0] sm:%s3]
    %79 = vst [vmem:[#allocation1] sm:%s3] %v78
    %v80 = vld [vmem:[#allocation1] sm:$0x1]
    %s81 = scalar_lea.vmem [#allocation1], 31
    %v82 = vld [vmem:[%s81] sm:$0x2]
    %vm83 = vcmask 1041409
    %v84 = vsel %vm83, %v82, %v80
    %s85 = scalar_lea.vmem [#allocation1], 62
    %v86 = vld [vmem:[%s85] sm:$0x4]
    %vm87 = vcmask 1042434
    %v88 = vsel %vm87, %v86, %v84
    %s89 = scalar_lea.vmem [#allocation1], 93
    %v90 = vld [vmem:[%s89] sm:$0x8]
    %vm91 = vcmask 1043459
    %v92 = vsel %vm91, %v90, %v88
    %vm93 = vcmask 31744
    %94 = vst.msk [vmem:[#allocation0] sm:$0xf] %vm93, %v92
    %s95 = scalar_lea.vmem [#allocation1], 27
    %v96 = vld [vmem:[%s95] sm:$0x1]
    %s97 = scalar_lea.vmem [#allocation1], 58
    %v98 = vld [vmem:[%s97] sm:$0x2]
    %vm99 = vcmask 1041409
    %v100 = vsel %vm99, %v98, %v96
    %s101 = scalar_lea.vmem [#allocation1], 89
    %v102 = vld [vmem:[%s101] sm:$0x4]
    %vm103 = vcmask 1042434
    %v104 = vsel %vm103, %v102, %v100
    %s105 = scalar_lea.vmem [#allocation1], 120
    %v106 = vld [vmem:[%s105] sm:$0x8]
    %vm107 = vcmask 1043459
    %v108 = vsel %vm107, %v106, %v104
    %109 = vrot.lane.b32.xlu0 %v108, 60
    %v110 = vpop.permute.xlu0 %109
    %vm111 = vcmask 523744
    %112 = vst.msk [vmem:[#allocation0] sm:$0xf] %vm111, %v110
    %s113 = scalar_lea.vmem [#allocation1], 26
    %v114 = vld [vmem:[%s113] sm:$0x1]
    %s115 = scalar_lea.vmem [#allocation1], 57
    %v116 = vld [vmem:[%s115] sm:$0x2]
    %vm117 = vcmask 1041409
    %v118 = vsel %vm117, %v116, %v114
    %s119 = scalar_lea.vmem [#allocation1], 88
    %v120 = vld [vmem:[%s119] sm:$0x4]
    %vm121 = vcmask 1042434
    %v122 = vsel %vm121, %v120, %v118
    %s123 = scalar_lea.vmem [#allocation1], 119
    %v124 = vld [vmem:[%s123] sm:$0x8]
    %vm125 = vcmask 1043459
    %v126 = vsel %vm125, %v124, %v122
    %127 = vrot.lane.b32.xlu0 %v126, 56
    %v128 = vpop.permute.xlu0 %127
    %vm129 = vcmask 490944
    %130 = vst.msk [vmem:[#allocation0] sm:$0xf] %vm129, %v128
    %s131 = scalar_lea.vmem [#allocation1], 25
    %v132 = vld [vmem:[%s131] sm:$0x1]
    %s133 = scalar_lea.vmem [#allocation1], 56
    %v134 = vld [vmem:[%s133] sm:$0x2]
    %vm135 = vcmask 1041409
    %v136 = vsel %vm135, %v134, %v132
    %s137 = scalar_lea.vmem [#allocation1], 87
    %v138 = vld [vmem:[%s137] sm:$0x4]
    %vm139 = vcmask 1042434
    %v140 = vsel %vm139, %v138, %v136
    %s141 = scalar_lea.vmem [#allocation1], 118
    %v142 = vld [vmem:[%s141] sm:$0x8]
    %vm143 = vcmask 1043459
    %v144 = vsel %vm143, %v142, %v140
    %145 = vrot.lane.b32.xlu0 %v144, 52
    %v146 = vpop.permute.xlu0 %145
    %vm147 = vcmask 458144
    %148 = vst.msk [vmem:[#allocation0] sm:$0xf] %vm147, %v146
    %s149 = scalar_lea.vmem [#allocation1], 24
    %v150 = vld [vmem:[%s149] sm:$0x1]
    %s151 = scalar_lea.vmem [#allocation1], 55
    %v152 = vld [vmem:[%s151] sm:$0x2]
    %vm153 = vcmask 1041409
    %v154 = vsel %vm153, %v152, %v150
    %s155 = scalar_lea.vmem [#allocation1], 86
    %v156 = vld [vmem:[%s155] sm:$0x4]
    %vm157 = vcmask 1042434
    %v158 = vsel %vm157, %v156, %v154
    %s159 = scalar_lea.vmem [#allocation1], 117
    %v160 = vld [vmem:[%s159] sm:$0x8]
    %vm161 = vcmask 1043459
    %v162 = vsel %vm161, %v160, %v158
    %163 = vrot.lane.b32.xlu0 %v162, 48
    %v164 = vpop.permute.xlu0 %163
    %vm165 = vcmask 425344
    %166 = vst.msk [vmem:[#allocation0] sm:$0xf] %vm165, %v164
    %s167 = scalar_lea.vmem [#allocation1], 19
    %v168 = vld [vmem:[%s167] sm:$0x1]
    %s169 = scalar_lea.vmem [#allocation1], 50
    %v170 = vld [vmem:[%s169] sm:$0x2]
    %vm171 = vcmask 1041409
    %v172 = vsel %vm171, %v170, %v168
    %s173 = scalar_lea.vmem [#allocation1], 81
    %v174 = vld [vmem:[%s173] sm:$0x4]
    %vm175 = vcmask 1042434
    %v176 = vsel %vm175, %v174, %v172
    %s177 = scalar_lea.vmem [#allocation1], 112
    %v178 = vld [vmem:[%s177] sm:$0x8]
    %vm179 = vcmask 1043459
    %v180 = vsel %vm179, %v178, %v176
    %181 = vrot.lane.b32.xlu0 %v180, 44
    %v182 = vpop.permute.xlu0 %181
    %vm183 = vcmask 392544
    %184 = vst.msk [vmem:[#allocation0] sm:$0xf] %vm183, %v182
    %s185 = scalar_lea.vmem [#allocation1], 18
    %v186 = vld [vmem:[%s185] sm:$0x1]
    %s187 = scalar_lea.vmem [#allocation1], 49
    %v188 = vld [vmem:[%s187] sm:$0x2]
    %vm189 = vcmask 1041409
    %v190 = vsel %vm189, %v188, %v186
    %s191 = scalar_lea.vmem [#allocation1], 80
    %v192 = vld [vmem:[%s191] sm:$0x4]
    %vm193 = vcmask 1042434
    %v194 = vsel %vm193, %v192, %v190
    %s195 = scalar_lea.vmem [#allocation1], 111
    %v196 = vld [vmem:[%s195] sm:$0x8]
    %vm197 = vcmask 1043459
    %v198 = vsel %vm197, %v196, %v194
    %199 = vrot.lane.b32.xlu0 %v198, 40
    %v200 = vpop.permute.xlu0 %199
    %vm201 = vcmask 359744
    %202 = vst.msk [vmem:[#allocation0] sm:$0xf] %vm201, %v200
    %s203 = scalar_lea.vmem [#allocation1], 17
    %v204 = vld [vmem:[%s203] sm:$0x1]
    %s205 = scalar_lea.vmem [#allocation1], 48
    %v206 = vld [vmem:[%s205] sm:$0x2]
    %vm207 = vcmask 1041409
    %v208 = vsel %vm207, %v206, %v204
    %s209 = scalar_lea.vmem [#allocation1], 79
    %v210 = vld [vmem:[%s209] sm:$0x4]
    %vm211 = vcmask 1042434
    %v212 = vsel %vm211, %v210, %v208
    %s213 = scalar_lea.vmem [#allocation1], 110
    %v214 = vld [vmem:[%s213] sm:$0x8]
    %vm215 = vcmask 1043459
    %v216 = vsel %vm215, %v214, %v212
    %217 = vrot.lane.b32.xlu0 %v216, 36
    %v218 = vpop.permute.xlu0 %217
    %vm219 = vcmask 326944
    %220 = vst.msk [vmem:[#allocation0] sm:$0xf] %vm219, %v218
    %s221 = scalar_lea.vmem [#allocation1], 16
    %v222 = vld [vmem:[%s221] sm:$0x1]
    %s223 = scalar_lea.vmem [#allocation1], 47
    %v224 = vld [vmem:[%s223] sm:$0x2]
    %vm225 = vcmask 1041409
    %v226 = vsel %vm225, %v224, %v222
    %s227 = scalar_lea.vmem [#allocation1], 78
    %v228 = vld [vmem:[%s227] sm:$0x4]
    %vm229 = vcmask 1042434
    %v230 = vsel %vm229, %v228, %v226
    %s231 = scalar_lea.vmem [#allocation1], 109
    %v232 = vld [vmem:[%s231] sm:$0x8]
    %vm233 = vcmask 1043459
    %v234 = vsel %vm233, %v232, %v230
    %235 = vrot.lane.b32.xlu0 %v234, 32
    %v236 = vpop.permute.xlu0 %235
    %vm237 = vcmask 294144
    %238 = vst.msk [vmem:[#allocation0] sm:$0xf] %vm237, %v236
    %s239 = scalar_lea.vmem [#allocation1], 11
    %v240 = vld [vmem:[%s239] sm:$0x1]
    %s241 = scalar_lea.vmem [#allocation1], 42
    %v242 = vld [vmem:[%s241] sm:$0x2]
    %vm243 = vcmask 1041409
    %v244 = vsel %vm243, %v242, %v240
    %s245 = scalar_lea.vmem [#allocation1], 73
    %v246 = vld [vmem:[%s245] sm:$0x4]
    %vm247 = vcmask 1042434
    %v248 = vsel %vm247, %v246, %v244
    %s249 = scalar_lea.vmem [#allocation1], 104
    %v250 = vld [vmem:[%s249] sm:$0x8]
    %vm251 = vcmask 1043459
    %v252 = vsel %vm251, %v250, %v248
    %253 = vrot.lane.b32.xlu0 %v252, 28
    %v254 = vpop.permute.xlu0 %253
    %vm255 = vcmask 261344
    %256 = vst.msk [vmem:[#allocation0] sm:$0xf] %vm255, %v254
    %s257 = scalar_lea.vmem [#allocation1], 10
    %v258 = vld [vmem:[%s257] sm:$0x1]
    %s259 = scalar_lea.vmem [#allocation1], 41
    %v260 = vld [vmem:[%s259] sm:$0x2]
    %vm261 = vcmask 1041409
    %v262 = vsel %vm261, %v260, %v258
    %s263 = scalar_lea.vmem [#allocation1], 72
    %v264 = vld [vmem:[%s263] sm:$0x4]
    %vm265 = vcmask 1042434
    %v266 = vsel %vm265, %v264, %v262
    %s267 = scalar_lea.vmem [#allocation1], 103
    %v268 = vld [vmem:[%s267] sm:$0x8]
    %vm269 = vcmask 1043459
    %v270 = vsel %vm269, %v268, %v266
    %271 = vrot.lane.b32.xlu0 %v270, 24
    %v272 = vpop.permute.xlu0 %271
    %vm273 = vcmask 228544
    %274 = vst.msk [vmem:[#allocation0] sm:$0xf] %vm273, %v272
    %s275 = scalar_lea.vmem [#allocation1], 9
    %v276 = vld [vmem:[%s275] sm:$0x1]
    %s277 = scalar_lea.vmem [#allocation1], 40
    %v278 = vld [vmem:[%s277] sm:$0x2]
    %vm279 = vcmask 1041409
    %v280 = vsel %vm279, %v278, %v276
    %s281 = scalar_lea.vmem [#allocation1], 71
    %v282 = vld [vmem:[%s281] sm:$0x4]
    %vm283 = vcmask 1042434
    %v284 = vsel %vm283, %v282, %v280
    %s285 = scalar_lea.vmem [#allocation1], 102
    %v286 = vld [vmem:[%s285] sm:$0x8]
    %vm287 = vcmask 1043459
    %v288 = vsel %vm287, %v286, %v284
    %289 = vrot.lane.b32.xlu0 %v288, 20
    %v290 = vpop.permute.xlu0 %289
    %vm291 = vcmask 195744
    %292 = vst.msk [vmem:[#allocation0] sm:$0xf] %vm291, %v290
    %s293 = scalar_lea.vmem [#allocation1], 8
    %v294 = vld [vmem:[%s293] sm:$0x1]
    %s295 = scalar_lea.vmem [#allocation1], 39
    %v296 = vld [vmem:[%s295] sm:$0x2]
    %vm297 = vcmask 1041409
    %v298 = vsel %vm297, %v296, %v294
    %s299 = scalar_lea.vmem [#allocation1], 70
    %v300 = vld [vmem:[%s299] sm:$0x4]
    %vm301 = vcmask 1042434
    %v302 = vsel %vm301, %v300, %v298
    %s303 = scalar_lea.vmem [#allocation1], 101
    %v304 = vld [vmem:[%s303] sm:$0x8]
    %vm305 = vcmask 1043459
    %v306 = vsel %vm305, %v304, %v302
    %307 = vrot.lane.b32.xlu0 %v306, 16
    %v308 = vpop.permute.xlu0 %307
    %vm309 = vcmask 162944
    %310 = vst.msk [vmem:[#allocation0] sm:$0xf] %vm309, %v308
    %s311 = scalar_lea.vmem [#allocation1], 3
    %v312 = vld [vmem:[%s311] sm:$0x1]
    %s313 = scalar_lea.vmem [#allocation1], 34
    %v314 = vld [vmem:[%s313] sm:$0x2]
    %vm315 = vcmask 1041409
    %v316 = vsel %vm315, %v314, %v312
    %s317 = scalar_lea.vmem [#allocation1], 65
    %v318 = vld [vmem:[%s317] sm:$0x4]
    %vm319 = vcmask 1042434
    %v320 = vsel %vm319, %v318, %v316
    %s321 = scalar_lea.vmem [#allocation1], 96
    %v322 = vld [vmem:[%s321] sm:$0x8]
    %vm323 = vcmask 1043459
    %v324 = vsel %vm323, %v322, %v320
    %325 = vrot.lane.b32.xlu0 %v324, 12
    %v326 = vpop.permute.xlu0 %325
    %vm327 = vcmask 130144
    %328 = vst.msk [vmem:[#allocation0] sm:$0xf] %vm327, %v326
    %s329 = scalar_lea.vmem [#allocation1], 2
    %v330 = vld [vmem:[%s329] sm:$0x1]
    %s331 = scalar_lea.vmem [#allocation1], 33
    %v332 = vld [vmem:[%s331] sm:$0x2]
    %vm333 = vcmask 1041409
    %v334 = vsel %vm333, %v332, %v330
    %s335 = scalar_lea.vmem [#allocation1], 64
    %v336 = vld [vmem:[%s335] sm:$0x4]
    %vm337 = vcmask 1042434
    %v338 = vsel %vm337, %v336, %v334
    %s339 = scalar_lea.vmem [#allocation1], 95
    %v340 = vld [vmem:[%s339] sm:$0x8]
    %vm341 = vcmask 1043459
    %v342 = vsel %vm341, %v340, %v338
    %343 = vrot.lane.b32.xlu0 %v342, 8
    %v344 = vpop.permute.xlu0 %343
    %vm345 = vcmask 97344
    %346 = vst.msk [vmem:[#allocation0] sm:$0xf] %vm345, %v344
    %s347 = scalar_lea.vmem [#allocation1], 1
    %v348 = vld [vmem:[%s347] sm:$0x1]
    %s349 = scalar_lea.vmem [#allocation1], 32
    %v350 = vld [vmem:[%s349] sm:$0x2]
    %vm351 = vcmask 1041409
    %v352 = vsel %vm351, %v350, %v348
    %s353 = scalar_lea.vmem [#allocation1], 63
    %v354 = vld [vmem:[%s353] sm:$0x4]
    %vm355 = vcmask 1042434
    %v356 = vsel %vm355, %v354, %v352
    %s357 = scalar_lea.vmem [#allocation1], 94
    %v358 = vld [vmem:[%s357] sm:$0x8]
    %vm359 = vcmask 1043459
    %v360 = vsel %vm359, %v358, %v356
    %361 = vrot.lane.b32.xlu0 %v360, 4
    %v362 = vpop.permute.xlu0 %361
    %vm363 = vcmask 64544
    %364 = vst.msk [vmem:[#allocation0] sm:$0xf] %vm363, %v362
    %s366 = sshllo.u32 0, 4
    %v368 = vld [vmem:[#allocation0] sm:%s366]
    %s369 = sshllo.u32 0, 4
    %370 = vst [vmem:[%s1] sm:%s369] %v368

// kernel: tile.8
$region0: #{tile.8}
  #allocation0 [shape = 's32[1]{0}', space=sflag, size = 0x4, scoped, tag = 'scoped memory for tile.8']
  %s0 = inlined_call_operand.vmem [shape: f32[4], index: 0, kind: input, shape index: {}]
  %s1 = inlined_call_operand.vmem [shape: f32[16,4], index: 1, kind: output, shape index: {}]
  // Predicated region
  $region2: #{tile.8} parent=0 // pred_check
    _
  $region3: #{tile.8} parent=0 // pred_check_branch
    %3 = sbr.rel (0) target = $region5
  $region4: #{tile.8} parent=0 // pred_region
    _
  $region5: #{tile.8} parent=0 // pred_fallthru
    _
  %v4 = vld [vmem:[%s0] ss:$0 sm:$0xff]
  %5 = vst [vmem:[%s1] sm:$0xff] %v4
  %s6 = scalar_lea.vmem %s1, 8
  %7 = vst [vmem:[%s6] sm:$0xff] %v4

// kernel: tile.0
$region0: #{tile.0}
  %s0 = inlined_call_operand.vmem [shape: f32[16,4], index: 0, kind: input, shape index: {}]
  %s1 = inlined_call_operand.vmem [shape: f32[64,1], index: 1, kind: output, shape index: {}]
  %v2 = vld [vmem:[%s0] sm:$0xff]
  %vm3 = vcmask 7168
  %4 = vst.msk [vmem:[%s1] ss:$4 sm:$0xff] %vm3, %v2
  %s5 = scalar_lea.vmem %s0, 8
  %v6 = vld [vmem:[%s5] sm:$0xff]
  %vm7 = vcmask 7168
  %s8 = scalar_lea.vmem %s1, 32
  %9 = vst.msk [vmem:[%s8] ss:$4 sm:$0xff] %vm7, %v6
  %v10 = vld [vmem:[%s0] sm:$0xff]
  %11 = vrot.lane.b32.xlu0 %v10, 127
  %v12 = vpop.permute.xlu0 %11
  %vm13 = vcmask 7168
  %s14 = scalar_lea.vmem %s1, 1
  %15 = vst.msk [vmem:[%s14] ss:$4 sm:$0xff] %vm13, %v12
  %s16 = scalar_lea.vmem %s0, 8
  %v17 = vld [vmem:[%s16] sm:$0xff]
  %18 = vrot.lane.b32.xlu0 %v17, 127
  %v19 = vpop.permute.xlu0 %18
  %vm20 = vcmask 7168
  %s21 = scalar_lea.vmem %s1, 33
  %22 = vst.msk [vmem:[%s21] ss:$4 sm:$0xff] %vm20, %v19
  %v23 = vld [vmem:[%s0] sm:$0xff]
  %24 = vrot.lane.b32.xlu0 %v23, 126
  %v25 = vpop.permute.xlu0 %24
  %vm26 = vcmask 7168
  %s27 = scalar_lea.vmem %s1, 2
  %28 = vst.msk [vmem:[%s27] ss:$4 sm:$0xff] %vm26, %v25
  %s29 = scalar_lea.vmem %s0, 8
  %v30 = vld [vmem:[%s29] sm:$0xff]
  %31 = vrot.lane.b32.xlu0 %v30, 126
  %v32 = vpop.permute.xlu0 %31
  %vm33 = vcmask 7168
  %s34 = scalar_lea.vmem %s1, 34
  %35 = vst.msk [vmem:[%s34] ss:$4 sm:$0xff] %vm33, %v32
  %v36 = vld [vmem:[%s0] sm:$0xff]
  %37 = vrot.lane.b32.xlu0 %v36, 125
  %v38 = vpop.permute.xlu0 %37
  %vm39 = vcmask 7168
  %s40 = scalar_lea.vmem %s1, 3
  %41 = vst.msk [vmem:[%s40] ss:$4 sm:$0xff] %vm39, %v38
  %s42 = scalar_lea.vmem %s0, 8
  %v43 = vld [vmem:[%s42] sm:$0xff]
  %44 = vrot.lane.b32.xlu0 %v43, 125
  %v45 = vpop.permute.xlu0 %44
  %vm46 = vcmask 7168
  %s47 = scalar_lea.vmem %s1, 35
  %48 = vst.msk [vmem:[%s47] ss:$4 sm:$0xff] %vm46, %v45

// kernel: discriminator_forward.1
$region0: #{discriminator_forward.1}
  #allocation0 [shape = 'u32[]', space=smem, size = 0x4, offset = 0x4, fixed_abs, tag = 'smem constant byte address 0x4 - core index']
  #allocation1 [shape = 'u32[144,128]{1,0:T(1,128)}', space=vmem, size = 0x12000, scoped, tag = 'internal scratch']
  #allocation2 [shape = 'f32[1]{0:T(128)S(6)}', space=smem, size = 0x200, scoped, tag = 'scoped memory for discriminator_forward.1']
  %s0 = inlined_call_operand.vmem [shape: bf16[1024,128], index: 0, kind: input, shape index: {}]
  %s1 = inlined_call_operand.vmem [shape: bf16[64,1024], index: 1, kind: input, shape index: {}]
  %s2 = inlined_call_operand.vmem [shape: f32[64,1], index: 2, kind: input, shape index: {}]
  %s3 = inlined_call_operand.vmem [shape: f32[64,128], index: 3, kind: input, shape index: {}]
  %s4 = inlined_call_operand.vmem [shape: bf16[64,128], index: 4, kind: input, shape index: {}]
  %s5 = inlined_call_operand.vmem [shape: bf16[64,64], index: 5, kind: input, shape index: {}]
  %s6 = inlined_call_operand.vmem [shape: bf16[64,64], index: 6, kind: input, shape index: {}]
  %s7 = inlined_call_operand.vmem [shape: f32[64,1], index: 7, kind: input, shape index: {}]
  %s8 = inlined_call_operand.vmem [shape: f32[64,1], index: 8, kind: input, shape index: {}]
  %s9 = inlined_call_operand.<no memory space> [shape: f32[1], index: 9, kind: input, shape index: {}]
  %s10 = inlined_call_operand.vmem [shape: f32[1,128], index: 10, kind: output, shape index: {}]
  %s11 = sld [smem:[#allocation0]]
  $region50: #{discriminator_forward.1} parent=0
    _
  %s13 = ssub.s32 1, %s11
  %s14 = scalar_select 0, %s13, %s11
  %15 = sst [smem:[#allocation2]] %s9
  // Predicated region
  $region2: #{discriminator_forward.1} parent=0 // pred_check
    _
  $region3: #{discriminator_forward.1} parent=0 // pred_check_branch
    %17 = sbr.rel (0) target = $region5
  $region4: #{discriminator_forward.1} parent=0 // pred_region
    _
  $region5: #{discriminator_forward.1} parent=0 // pred_fallthru
    _
  // Predicated region
  $region6: #{discriminator_forward.1} parent=0 // pred_check
    _
  $region7: #{discriminator_forward.1} parent=0 // pred_check_branch
    %19 = sbr.rel (0) target = $region9
  $region8: #{discriminator_forward.1} parent=0 // pred_region
    _
  $region9: #{discriminator_forward.1} parent=0 // pred_fallthru
    _
  // Predicated region
  $region10: #{discriminator_forward.1} parent=0 // pred_check
    _
  $region11: #{discriminator_forward.1} parent=0 // pred_check_branch
    %21 = sbr.rel (0) target = $region13
  $region12: #{discriminator_forward.1} parent=0 // pred_region
    _
  $region13: #{discriminator_forward.1} parent=0 // pred_fallthru
    _
  // Predicated region
  $region14: #{discriminator_forward.1} parent=0 // pred_check
    _
  $region15: #{discriminator_forward.1} parent=0 // pred_check_branch
    %23 = sbr.rel (0) target = $region17
  $region16: #{discriminator_forward.1} parent=0 // pred_region
    _
  $region17: #{discriminator_forward.1} parent=0 // pred_fallthru
    _
  // Predicated region
  $region18: #{discriminator_forward.1} parent=0 // pred_check
    _
  $region19: #{discriminator_forward.1} parent=0 // pred_check_branch
    %25 = sbr.rel (0) target = $region21
  $region20: #{discriminator_forward.1} parent=0 // pred_region
    _
  $region21: #{discriminator_forward.1} parent=0 // pred_fallthru
    _
  // Predicated region
  $region22: #{discriminator_forward.1} parent=0 // pred_check
    _
  $region23: #{discriminator_forward.1} parent=0 // pred_check_branch
    %27 = sbr.rel (0) target = $region25
  $region24: #{discriminator_forward.1} parent=0 // pred_region
    _
  $region25: #{discriminator_forward.1} parent=0 // pred_fallthru
    _
  // Predicated region
  $region26: #{discriminator_forward.1} parent=0 // pred_check
    _
  $region27: #{discriminator_forward.1} parent=0 // pred_check_branch
    %29 = sbr.rel (0) target = $region29
  $region28: #{discriminator_forward.1} parent=0 // pred_region
    _
  $region29: #{discriminator_forward.1} parent=0 // pred_fallthru
    _
  // Predicated region
  $region30: #{discriminator_forward.1} parent=0 // pred_check
    _
  $region31: #{discriminator_forward.1} parent=0 // pred_check_branch
    %31 = sbr.rel (0) target = $region33
  $region32: #{discriminator_forward.1} parent=0 // pred_region
    _
  $region33: #{discriminator_forward.1} parent=0 // pred_fallthru
    _
  // Predicated region
  $region34: #{discriminator_forward.1} parent=0 // pred_check
    _
  $region35: #{discriminator_forward.1} parent=0 // pred_check_branch
    %33 = sbr.rel (0) target = $region37
  $region36: #{discriminator_forward.1} parent=0 // pred_region
    _
  $region37: #{discriminator_forward.1} parent=0 // pred_fallthru
    _
  // Predicated region
  $region38: #{discriminator_forward.1} parent=0 // pred_check
    _
  $region39: #{discriminator_forward.1} parent=0 // pred_check_branch
    %35 = sbr.rel (0) target = $region41
  $region40: #{discriminator_forward.1} parent=0 // pred_region
    _
  $region41: #{discriminator_forward.1} parent=0 // pred_fallthru
    _
  %v37 = vld [vmem:[%s1] sm:$0xff]
  %v38 = vld [vmem:[%s1 + $0x8] sm:$0xff]
  %v39 = vld [vmem:[%s1 + $0x10] sm:$0xff]
  %v40 = vld [vmem:[%s1 + $0x18] sm:$0xff]
  %v41 = vld [vmem:[%s1 + $0x20] sm:$0xff]
  %v42 = vld [vmem:[%s1 + $0x28] sm:$0xff]
  %v43 = vld [vmem:[%s1 + $0x30] sm:$0xff]
  %v44 = vld [vmem:[%s1 + $0x38] sm:$0xff]
  %v45 = vld [vmem:[%s1 + $0x40] sm:$0xff]
  %v46 = vld [vmem:[%s1 + $0x48] sm:$0xff]
  %v47 = vld [vmem:[%s1 + $0x50] sm:$0xff]
  %v48 = vld [vmem:[%s1 + $0x58] sm:$0xff]
  %v49 = vld [vmem:[%s1 + $0x60] sm:$0xff]
  %v50 = vld [vmem:[%s1 + $0x68] sm:$0xff]
  %v51 = vld [vmem:[%s1 + $0x70] sm:$0xff]
  %v52 = vld [vmem:[%s1 + $0x78] sm:$0xff]
  %v53 = vld [vmem:[%s1 + $0x80] sm:$0xff]
  %v54 = vld [vmem:[%s1 + $0x88] sm:$0xff]
  %v55 = vld [vmem:[%s1 + $0x90] sm:$0xff]
  %v56 = vld [vmem:[%s1 + $0x98] sm:$0xff]
  %v57 = vld [vmem:[%s1 + $0xa0] sm:$0xff]
  %v58 = vld [vmem:[%s1 + $0xa8] sm:$0xff]
  %v59 = vld [vmem:[%s1 + $0xb0] sm:$0xff]
  %v60 = vld [vmem:[%s1 + $0xb8] sm:$0xff]
  %v61 = vld [vmem:[%s1 + $0xc0] sm:$0xff]
  %v62 = vld [vmem:[%s1 + $0xc8] sm:$0xff]
  %v63 = vld [vmem:[%s1 + $0xd0] sm:$0xff]
  %v64 = vld [vmem:[%s1 + $0xd8] sm:$0xff]
  %v65 = vld [vmem:[%s1 + $0xe0] sm:$0xff]
  %v66 = vld [vmem:[%s1 + $0xe8] sm:$0xff]
  %v67 = vld [vmem:[%s1 + $0xf0] sm:$0xff]
  %v68 = vld [vmem:[%s1 + $0xf8] sm:$0xff]
  %v69 = vld [vmem:[%s0] sm:$0xf]
  %v70 = vld [vmem:[%s0 + $0x4] sm:$0xf]
  %v71 = vld [vmem:[%s0 + $0x8] sm:$0xf]
  %v72 = vld [vmem:[%s0 + $0xc] sm:$0xf]
  %v73 = vld [vmem:[%s0 + $0x10] sm:$0xf]
  %v74 = vld [vmem:[%s0 + $0x14] sm:$0xf]
  %v75 = vld [vmem:[%s0 + $0x18] sm:$0xf]
  %v76 = vld [vmem:[%s0 + $0x1c] sm:$0xf]
  %v77 = vld [vmem:[%s0 + $0x20] sm:$0xf]
  %v78 = vld [vmem:[%s0 + $0x24] sm:$0xf]
  %v79 = vld [vmem:[%s0 + $0x28] sm:$0xf]
  %v80 = vld [vmem:[%s0 + $0x2c] sm:$0xf]
  %v81 = vld [vmem:[%s0 + $0x30] sm:$0xf]
  %v82 = vld [vmem:[%s0 + $0x34] sm:$0xf]
  %v83 = vld [vmem:[%s0 + $0x38] sm:$0xf]
  %v84 = vld [vmem:[%s0 + $0x3c] sm:$0xf]
  %v85 = vld [vmem:[%s0 + $0x40] sm:$0xf]
  %v86 = vld [vmem:[%s0 + $0x44] sm:$0xf]
  %v87 = vld [vmem:[%s0 + $0x48] sm:$0xf]
  %v88 = vld [vmem:[%s0 + $0x4c] sm:$0xf]
  %v89 = vld [vmem:[%s0 + $0x50] sm:$0xf]
  %v90 = vld [vmem:[%s0 + $0x54] sm:$0xf]
  %v91 = vld [vmem:[%s0 + $0x58] sm:$0xf]
  %v92 = vld [vmem:[%s0 + $0x5c] sm:$0xf]
  %v93 = vld [vmem:[%s0 + $0x60] sm:$0xf]
  %v94 = vld [vmem:[%s0 + $0x64] sm:$0xf]
  %v95 = vld [vmem:[%s0 + $0x68] sm:$0xf]
  %v96 = vld [vmem:[%s0 + $0x6c] sm:$0xf]
  %v97 = vld [vmem:[%s0 + $0x70] sm:$0xf]
  %v98 = vld [vmem:[%s0 + $0x74] sm:$0xf]
  %v99 = vld [vmem:[%s0 + $0x78] sm:$0xf]
  %v100 = vld [vmem:[%s0 + $0x7c] sm:$0xf]
  %v101 = vld [vmem:[%s0 + $0x80] sm:$0xf]
  %v102 = vld [vmem:[%s0 + $0x84] sm:$0xf]
  %v103 = vld [vmem:[%s0 + $0x88] sm:$0xf]
  %v104 = vld [vmem:[%s0 + $0x8c] sm:$0xf]
  %v105 = vld [vmem:[%s0 + $0x90] sm:$0xf]
  %v106 = vld [vmem:[%s0 + $0x94] sm:$0xf]
  %v107 = vld [vmem:[%s0 + $0x98] sm:$0xf]
  %v108 = vld [vmem:[%s0 + $0x9c] sm:$0xf]
  %v109 = vld [vmem:[%s0 + $0xa0] sm:$0xf]
  %v110 = vld [vmem:[%s0 + $0xa4] sm:$0xf]
  %v111 = vld [vmem:[%s0 + $0xa8] sm:$0xf]
  %v112 = vld [vmem:[%s0 + $0xac] sm:$0xf]
  %v113 = vld [vmem:[%s0 + $0xb0] sm:$0xf]
  %v114 = vld [vmem:[%s0 + $0xb4] sm:$0xf]
  %v115 = vld [vmem:[%s0 + $0xb8] sm:$0xf]
  %v116 = vld [vmem:[%s0 + $0xbc] sm:$0xf]
  %v117 = vld [vmem:[%s0 + $0xc0] sm:$0xf]
  %v118 = vld [vmem:[%s0 + $0xc4] sm:$0xf]
  %v119 = vld [vmem:[%s0 + $0xc8] sm:$0xf]
  %v120 = vld [vmem:[%s0 + $0xcc] sm:$0xf]
  %v121 = vld [vmem:[%s0 + $0xd0] sm:$0xf]
  %v122 = vld [vmem:[%s0 + $0xd4] sm:$0xf]
  %v123 = vld [vmem:[%s0 + $0xd8] sm:$0xf]
  %v124 = vld [vmem:[%s0 + $0xdc] sm:$0xf]
  %v125 = vld [vmem:[%s0 + $0xe0] sm:$0xf]
  %v126 = vld [vmem:[%s0 + $0xe4] sm:$0xf]
  %v127 = vld [vmem:[%s0 + $0xe8] sm:$0xf]
  %v128 = vld [vmem:[%s0 + $0xec] sm:$0xf]
  %v129 = vld [vmem:[%s0 + $0xf0] sm:$0xf]
  %v130 = vld [vmem:[%s0 + $0xf4] sm:$0xf]
  %v131 = vld [vmem:[%s0 + $0xf8] sm:$0xf]
  %v132 = vld [vmem:[%s0 + $0xfc] sm:$0xf]
  %v133 = vld [vmem:[%s0 + $0x100] sm:$0xf]
  %v134 = vld [vmem:[%s0 + $0x104] sm:$0xf]
  %v135 = vld [vmem:[%s0 + $0x108] sm:$0xf]
  %v136 = vld [vmem:[%s0 + $0x10c] sm:$0xf]
  %v137 = vld [vmem:[%s0 + $0x110] sm:$0xf]
  %v138 = vld [vmem:[%s0 + $0x114] sm:$0xf]
  %v139 = vld [vmem:[%s0 + $0x118] sm:$0xf]
  %v140 = vld [vmem:[%s0 + $0x11c] sm:$0xf]
  %v141 = vld [vmem:[%s0 + $0x120] sm:$0xf]
  %v142 = vld [vmem:[%s0 + $0x124] sm:$0xf]
  %v143 = vld [vmem:[%s0 + $0x128] sm:$0xf]
  %v144 = vld [vmem:[%s0 + $0x12c] sm:$0xf]
  %v145 = vld [vmem:[%s0 + $0x130] sm:$0xf]
  %v146 = vld [vmem:[%s0 + $0x134] sm:$0xf]
  %v147 = vld [vmem:[%s0 + $0x138] sm:$0xf]
  %v148 = vld [vmem:[%s0 + $0x13c] sm:$0xf]
  %v149 = vld [vmem:[%s0 + $0x140] sm:$0xf]
  %v150 = vld [vmem:[%s0 + $0x144] sm:$0xf]
  %v151 = vld [vmem:[%s0 + $0x148] sm:$0xf]
  %v152 = vld [vmem:[%s0 + $0x14c] sm:$0xf]
  %v153 = vld [vmem:[%s0 + $0x150] sm:$0xf]
  %v154 = vld [vmem:[%s0 + $0x154] sm:$0xf]
  %v155 = vld [vmem:[%s0 + $0x158] sm:$0xf]
  %v156 = vld [vmem:[%s0 + $0x15c] sm:$0xf]
  %v157 = vld [vmem:[%s0 + $0x160] sm:$0xf]
  %v158 = vld [vmem:[%s0 + $0x164] sm:$0xf]
  %v159 = vld [vmem:[%s0 + $0x168] sm:$0xf]
  %v160 = vld [vmem:[%s0 + $0x16c] sm:$0xf]
  %v161 = vld [vmem:[%s0 + $0x170] sm:$0xf]
  %v162 = vld [vmem:[%s0 + $0x174] sm:$0xf]
  %v163 = vld [vmem:[%s0 + $0x178] sm:$0xf]
  %v164 = vld [vmem:[%s0 + $0x17c] sm:$0xf]
  %v165 = vld [vmem:[%s0 + $0x180] sm:$0xf]
  %v166 = vld [vmem:[%s0 + $0x184] sm:$0xf]
  %v167 = vld [vmem:[%s0 + $0x188] sm:$0xf]
  %v168 = vld [vmem:[%s0 + $0x18c] sm:$0xf]
  %v169 = vld [vmem:[%s0 + $0x190] sm:$0xf]
  %v170 = vld [vmem:[%s0 + $0x194] sm:$0xf]
  %v171 = vld [vmem:[%s0 + $0x198] sm:$0xf]
  %v172 = vld [vmem:[%s0 + $0x19c] sm:$0xf]
  %v173 = vld [vmem:[%s0 + $0x1a0] sm:$0xf]
  %v174 = vld [vmem:[%s0 + $0x1a4] sm:$0xf]
  %v175 = vld [vmem:[%s0 + $0x1a8] sm:$0xf]
  %v176 = vld [vmem:[%s0 + $0x1ac] sm:$0xf]
  %v177 = vld [vmem:[%s0 + $0x1b0] sm:$0xf]
  %v178 = vld [vmem:[%s0 + $0x1b4] sm:$0xf]
  %v179 = vld [vmem:[%s0 + $0x1b8] sm:$0xf]
  %v180 = vld [vmem:[%s0 + $0x1bc] sm:$0xf]
  %v181 = vld [vmem:[%s0 + $0x1c0] sm:$0xf]
  %v182 = vld [vmem:[%s0 + $0x1c4] sm:$0xf]
  %v183 = vld [vmem:[%s0 + $0x1c8] sm:$0xf]
  %v184 = vld [vmem:[%s0 + $0x1cc] sm:$0xf]
  %v185 = vld [vmem:[%s0 + $0x1d0] sm:$0xf]
  %v186 = vld [vmem:[%s0 + $0x1d4] sm:$0xf]
  %v187 = vld [vmem:[%s0 + $0x1d8] sm:$0xf]
  %v188 = vld [vmem:[%s0 + $0x1dc] sm:$0xf]
  %v189 = vld [vmem:[%s0 + $0x1e0] sm:$0xf]
  %v190 = vld [vmem:[%s0 + $0x1e4] sm:$0xf]
  %v191 = vld [vmem:[%s0 + $0x1e8] sm:$0xf]
  %v192 = vld [vmem:[%s0 + $0x1ec] sm:$0xf]
  %v193 = vld [vmem:[%s0 + $0x1f0] sm:$0xf]
  %v194 = vld [vmem:[%s0 + $0x1f4] sm:$0xf]
  %v195 = vld [vmem:[%s0 + $0x1f8] sm:$0xf]
  %v196 = vld [vmem:[%s0 + $0x1fc] sm:$0xf]
  %v197 = vld [vmem:[%s2] sm:$0xff]
  %v198 = vld [vmem:[%s2 + $0x8] sm:$0xff]
  %v199 = vld [vmem:[%s2 + $0x10] sm:$0xff]
  %v200 = vld [vmem:[%s2 + $0x18] sm:$0xff]
  %v201 = vld [vmem:[%s2 + $0x20] sm:$0xff]
  %v202 = vld [vmem:[%s2 + $0x28] sm:$0xff]
  %v203 = vld [vmem:[%s2 + $0x30] sm:$0xff]
  %v204 = vld [vmem:[%s2 + $0x38] sm:$0xff]
  %206 = vset.pattern.permute.xlu0 0
  %207 = vperm.xlu0 %206, %v197
  %v208 = vpop.permute.xlu0 %207
  %211 = vset.pattern.permute.xlu0 0
  %212 = vperm.xlu0 %211, %v198
  %v213 = vpop.permute.xlu0 %212
  %216 = vset.pattern.permute.xlu0 0
  %217 = vperm.xlu0 %216, %v199
  %v218 = vpop.permute.xlu0 %217
  %221 = vset.pattern.permute.xlu0 0
  %222 = vperm.xlu0 %221, %v200
  %v223 = vpop.permute.xlu0 %222
  %226 = vset.pattern.permute.xlu0 0
  %227 = vperm.xlu0 %226, %v201
  %v228 = vpop.permute.xlu0 %227
  %231 = vset.pattern.permute.xlu0 0
  %232 = vperm.xlu0 %231, %v202
  %v233 = vpop.permute.xlu0 %232
  %236 = vset.pattern.permute.xlu0 0
  %237 = vperm.xlu0 %236, %v203
  %v238 = vpop.permute.xlu0 %237
  %241 = vset.pattern.permute.xlu0 0
  %242 = vperm.xlu0 %241, %v204
  %v243 = vpop.permute.xlu0 %242
  %v277 = vunpack.c.l.b16 %v37
  %v278 = vunpack.c.h.b16 %v37
  %v279 = vunpack.c.l.b16 %v38
  %v280 = vunpack.c.h.b16 %v38
  %v281 = vunpack.c.l.b16 %v39
  %v282 = vunpack.c.h.b16 %v39
  %v283 = vunpack.c.l.b16 %v40
  %v284 = vunpack.c.h.b16 %v40
  %v285 = vunpack.c.l.b16 %v41
  %v286 = vunpack.c.h.b16 %v41
  %v287 = vunpack.c.l.b16 %v42
  %v288 = vunpack.c.h.b16 %v42
  %v289 = vunpack.c.l.b16 %v43
  %v290 = vunpack.c.h.b16 %v43
  %v291 = vunpack.c.l.b16 %v44
  %v292 = vunpack.c.h.b16 %v44
  %v293 = vunpack.c.l.b16 %v45
  %v294 = vunpack.c.h.b16 %v45
  %v295 = vunpack.c.l.b16 %v46
  %v296 = vunpack.c.h.b16 %v46
  %v297 = vunpack.c.l.b16 %v47
  %v298 = vunpack.c.h.b16 %v47
  %v299 = vunpack.c.l.b16 %v48
  %v300 = vunpack.c.h.b16 %v48
  %v301 = vunpack.c.l.b16 %v49
  %v302 = vunpack.c.h.b16 %v49
  %v303 = vunpack.c.l.b16 %v50
  %v304 = vunpack.c.h.b16 %v50
  %v305 = vunpack.c.l.b16 %v51
  %v306 = vunpack.c.h.b16 %v51
  %v307 = vunpack.c.l.b16 %v52
  %v308 = vunpack.c.h.b16 %v52
  %v309 = vunpack.c.l.b16 %v53
  %v310 = vunpack.c.h.b16 %v53
  %v311 = vunpack.c.l.b16 %v54
  %v312 = vunpack.c.h.b16 %v54
  %v313 = vunpack.c.l.b16 %v55
  %v314 = vunpack.c.h.b16 %v55
  %v315 = vunpack.c.l.b16 %v56
  %v316 = vunpack.c.h.b16 %v56
  %v317 = vunpack.c.l.b16 %v57
  %v318 = vunpack.c.h.b16 %v57
  %v319 = vunpack.c.l.b16 %v58
  %v320 = vunpack.c.h.b16 %v58
  %v321 = vunpack.c.l.b16 %v59
  %v322 = vunpack.c.h.b16 %v59
  %v323 = vunpack.c.l.b16 %v60
  %v324 = vunpack.c.h.b16 %v60
  %v325 = vunpack.c.l.b16 %v61
  %v326 = vunpack.c.h.b16 %v61
  %v327 = vunpack.c.l.b16 %v62
  %v328 = vunpack.c.h.b16 %v62
  %v329 = vunpack.c.l.b16 %v63
  %v330 = vunpack.c.h.b16 %v63
  %v331 = vunpack.c.l.b16 %v64
  %v332 = vunpack.c.h.b16 %v64
  %v333 = vunpack.c.l.b16 %v65
  %v334 = vunpack.c.h.b16 %v65
  %v335 = vunpack.c.l.b16 %v66
  %v336 = vunpack.c.h.b16 %v66
  %v337 = vunpack.c.l.b16 %v67
  %v338 = vunpack.c.h.b16 %v67
  %v339 = vunpack.c.l.b16 %v68
  %v340 = vunpack.c.h.b16 %v68
  %v341 = vpack.c.b16 %v285, %v277
  %v342 = vpack.c.b16 %v286, %v278
  %v343 = vpack.c.b16 %v287, %v279
  %v344 = vpack.c.b16 %v288, %v280
  %v345 = vpack.c.b16 %v289, %v281
  %v346 = vpack.c.b16 %v290, %v282
  %v347 = vpack.c.b16 %v291, %v283
  %v348 = vpack.c.b16 %v292, %v284
  %v349 = vpack.c.b16 %v301, %v293
  %v350 = vpack.c.b16 %v302, %v294
  %v351 = vpack.c.b16 %v303, %v295
  %v352 = vpack.c.b16 %v304, %v296
  %v353 = vpack.c.b16 %v305, %v297
  %v354 = vpack.c.b16 %v306, %v298
  %v355 = vpack.c.b16 %v307, %v299
  %v356 = vpack.c.b16 %v308, %v300
  %v357 = vpack.c.b16 %v317, %v309
  %v358 = vpack.c.b16 %v318, %v310
  %v359 = vpack.c.b16 %v319, %v311
  %v360 = vpack.c.b16 %v320, %v312
  %v361 = vpack.c.b16 %v321, %v313
  %v362 = vpack.c.b16 %v322, %v314
  %v363 = vpack.c.b16 %v323, %v315
  %v364 = vpack.c.b16 %v324, %v316
  %v365 = vpack.c.b16 %v333, %v325
  %v366 = vpack.c.b16 %v334, %v326
  %v367 = vpack.c.b16 %v335, %v327
  %v368 = vpack.c.b16 %v336, %v328
  %v369 = vpack.c.b16 %v337, %v329
  %v370 = vpack.c.b16 %v338, %v330
  %v371 = vpack.c.b16 %v339, %v331
  %v372 = vpack.c.b16 %v340, %v332
  %v533 = vunpack.c.l.b16 %v69
  %v534 = vunpack.c.l.b16 %v70
  %v535 = vunpack.c.l.b16 %v71
  %v536 = vunpack.c.l.b16 %v72
  %v537 = vunpack.c.l.b16 %v73
  %v538 = vunpack.c.l.b16 %v74
  %v539 = vunpack.c.l.b16 %v75
  %v540 = vunpack.c.l.b16 %v76
  %v541 = vunpack.c.l.b16 %v77
  %v542 = vunpack.c.l.b16 %v78
  %v543 = vunpack.c.l.b16 %v79
  %v544 = vunpack.c.l.b16 %v80
  %v545 = vunpack.c.l.b16 %v81
  %v546 = vunpack.c.l.b16 %v82
  %v547 = vunpack.c.l.b16 %v83
  %v548 = vunpack.c.l.b16 %v84
  %v549 = vunpack.c.l.b16 %v85
  %v550 = vunpack.c.l.b16 %v86
  %v551 = vunpack.c.l.b16 %v87
  %v552 = vunpack.c.l.b16 %v88
  %v553 = vunpack.c.l.b16 %v89
  %v554 = vunpack.c.l.b16 %v90
  %v555 = vunpack.c.l.b16 %v91
  %v556 = vunpack.c.l.b16 %v92
  %v557 = vunpack.c.l.b16 %v93
  %v558 = vunpack.c.l.b16 %v94
  %v559 = vunpack.c.l.b16 %v95
  %v560 = vunpack.c.l.b16 %v96
  %v561 = vunpack.c.l.b16 %v97
  %v562 = vunpack.c.l.b16 %v98
  %v563 = vunpack.c.l.b16 %v99
  %v564 = vunpack.c.l.b16 %v100
  %v565 = vunpack.c.l.b16 %v101
  %v566 = vunpack.c.l.b16 %v102
  %v567 = vunpack.c.l.b16 %v103
  %v568 = vunpack.c.l.b16 %v104
  %v569 = vunpack.c.l.b16 %v105
  %v570 = vunpack.c.l.b16 %v106
  %v571 = vunpack.c.l.b16 %v107
  %v572 = vunpack.c.l.b16 %v108
  %v573 = vunpack.c.l.b16 %v109
  %v574 = vunpack.c.l.b16 %v110
  %v575 = vunpack.c.l.b16 %v111
  %v576 = vunpack.c.l.b16 %v112
  %v577 = vunpack.c.l.b16 %v113
  %v578 = vunpack.c.l.b16 %v114
  %v579 = vunpack.c.l.b16 %v115
  %v580 = vunpack.c.l.b16 %v116
  %v581 = vunpack.c.l.b16 %v117
  %v582 = vunpack.c.l.b16 %v118
  %v583 = vunpack.c.l.b16 %v119
  %v584 = vunpack.c.l.b16 %v120
  %v585 = vunpack.c.l.b16 %v121
  %v586 = vunpack.c.l.b16 %v122
  %v587 = vunpack.c.l.b16 %v123
  %v588 = vunpack.c.l.b16 %v124
  %v589 = vunpack.c.l.b16 %v125
  %v590 = vunpack.c.l.b16 %v126
  %v591 = vunpack.c.l.b16 %v127
  %v592 = vunpack.c.l.b16 %v128
  %v593 = vunpack.c.l.b16 %v129
  %v594 = vunpack.c.l.b16 %v130
  %v595 = vunpack.c.l.b16 %v131
  %v596 = vunpack.c.l.b16 %v132
  %v597 = vunpack.c.l.b16 %v133
  %v598 = vunpack.c.l.b16 %v134
  %v599 = vunpack.c.l.b16 %v135
  %v600 = vunpack.c.l.b16 %v136
  %v601 = vunpack.c.l.b16 %v137
  %v602 = vunpack.c.l.b16 %v138
  %v603 = vunpack.c.l.b16 %v139
  %v604 = vunpack.c.l.b16 %v140
  %v605 = vunpack.c.l.b16 %v141
  %v606 = vunpack.c.l.b16 %v142
  %v607 = vunpack.c.l.b16 %v143
  %v608 = vunpack.c.l.b16 %v144
  %v609 = vunpack.c.l.b16 %v145
  %v610 = vunpack.c.l.b16 %v146
  %v611 = vunpack.c.l.b16 %v147
  %v612 = vunpack.c.l.b16 %v148
  %v613 = vunpack.c.l.b16 %v149
  %v614 = vunpack.c.l.b16 %v150
  %v615 = vunpack.c.l.b16 %v151
  %v616 = vunpack.c.l.b16 %v152
  %v617 = vunpack.c.l.b16 %v153
  %v618 = vunpack.c.l.b16 %v154
  %v619 = vunpack.c.l.b16 %v155
  %v620 = vunpack.c.l.b16 %v156
  %v621 = vunpack.c.l.b16 %v157
  %v622 = vunpack.c.l.b16 %v158
  %v623 = vunpack.c.l.b16 %v159
  %v624 = vunpack.c.l.b16 %v160
  %v625 = vunpack.c.l.b16 %v161
  %v626 = vunpack.c.l.b16 %v162
  %v627 = vunpack.c.l.b16 %v163
  %v628 = vunpack.c.l.b16 %v164
  %v629 = vunpack.c.l.b16 %v165
  %v630 = vunpack.c.l.b16 %v166
  %v631 = vunpack.c.l.b16 %v167
  %v632 = vunpack.c.l.b16 %v168
  %v633 = vunpack.c.l.b16 %v169
  %v634 = vunpack.c.l.b16 %v170
  %v635 = vunpack.c.l.b16 %v171
  %v636 = vunpack.c.l.b16 %v172
  %v637 = vunpack.c.l.b16 %v173
  %v638 = vunpack.c.l.b16 %v174
  %v639 = vunpack.c.l.b16 %v175
  %v640 = vunpack.c.l.b16 %v176
  %v641 = vunpack.c.l.b16 %v177
  %v642 = vunpack.c.l.b16 %v178
  %v643 = vunpack.c.l.b16 %v179
  %v644 = vunpack.c.l.b16 %v180
  %v645 = vunpack.c.l.b16 %v181
  %v646 = vunpack.c.l.b16 %v182
  %v647 = vunpack.c.l.b16 %v183
  %v648 = vunpack.c.l.b16 %v184
  %v649 = vunpack.c.l.b16 %v185
  %v650 = vunpack.c.l.b16 %v186
  %v651 = vunpack.c.l.b16 %v187
  %v652 = vunpack.c.l.b16 %v188
  %v653 = vunpack.c.l.b16 %v189
  %v654 = vunpack.c.l.b16 %v190
  %v655 = vunpack.c.l.b16 %v191
  %v656 = vunpack.c.l.b16 %v192
  %v657 = vunpack.c.l.b16 %v193
  %v658 = vunpack.c.l.b16 %v194
  %v659 = vunpack.c.l.b16 %v195
  %v660 = vunpack.c.l.b16 %v196
  %v661 = vpack.c.b16 %v534, %v533
  %v662 = vpack.c.b16 %v536, %v535
  %v663 = vpack.c.b16 %v538, %v537
  %v664 = vpack.c.b16 %v540, %v539
  %v665 = vpack.c.b16 %v542, %v541
  %v666 = vpack.c.b16 %v544, %v543
  %v667 = vpack.c.b16 %v546, %v545
  %v668 = vpack.c.b16 %v548, %v547
  %v669 = vpack.c.b16 %v550, %v549
  %v670 = vpack.c.b16 %v552, %v551
  %v671 = vpack.c.b16 %v554, %v553
  %v672 = vpack.c.b16 %v556, %v555
  %v673 = vpack.c.b16 %v558, %v557
  %v674 = vpack.c.b16 %v560, %v559
  %v675 = vpack.c.b16 %v562, %v561
  %v676 = vpack.c.b16 %v564, %v563
  %v677 = vpack.c.b16 %v566, %v565
  %v678 = vpack.c.b16 %v568, %v567
  %v679 = vpack.c.b16 %v570, %v569
  %v680 = vpack.c.b16 %v572, %v571
  %v681 = vpack.c.b16 %v574, %v573
  %v682 = vpack.c.b16 %v576, %v575
  %v683 = vpack.c.b16 %v578, %v577
  %v684 = vpack.c.b16 %v580, %v579
  %v685 = vpack.c.b16 %v582, %v581
  %v686 = vpack.c.b16 %v584, %v583
  %v687 = vpack.c.b16 %v586, %v585
  %v688 = vpack.c.b16 %v588, %v587
  %v689 = vpack.c.b16 %v590, %v589
  %v690 = vpack.c.b16 %v592, %v591
  %v691 = vpack.c.b16 %v594, %v593
  %v692 = vpack.c.b16 %v596, %v595
  %v693 = vpack.c.b16 %v598, %v597
  %v694 = vpack.c.b16 %v600, %v599
  %v695 = vpack.c.b16 %v602, %v601
  %v696 = vpack.c.b16 %v604, %v603
  %v697 = vpack.c.b16 %v606, %v605
  %v698 = vpack.c.b16 %v608, %v607
  %v699 = vpack.c.b16 %v610, %v609
  %v700 = vpack.c.b16 %v612, %v611
  %v701 = vpack.c.b16 %v614, %v613
  %v702 = vpack.c.b16 %v616, %v615
  %v703 = vpack.c.b16 %v618, %v617
  %v704 = vpack.c.b16 %v620, %v619
  %v705 = vpack.c.b16 %v622, %v621
  %v706 = vpack.c.b16 %v624, %v623
  %v707 = vpack.c.b16 %v626, %v625
  %v708 = vpack.c.b16 %v628, %v627
  %v709 = vpack.c.b16 %v630, %v629
  %v710 = vpack.c.b16 %v632, %v631
  %v711 = vpack.c.b16 %v634, %v633
  %v712 = vpack.c.b16 %v636, %v635
  %v713 = vpack.c.b16 %v638, %v637
  %v714 = vpack.c.b16 %v640, %v639
  %v715 = vpack.c.b16 %v642, %v641
  %v716 = vpack.c.b16 %v644, %v643
  %v717 = vpack.c.b16 %v646, %v645
  %v718 = vpack.c.b16 %v648, %v647
  %v719 = vpack.c.b16 %v650, %v649
  %v720 = vpack.c.b16 %v652, %v651
  %v721 = vpack.c.b16 %v654, %v653
  %v722 = vpack.c.b16 %v656, %v655
  %v723 = vpack.c.b16 %v658, %v657
  %v724 = vpack.c.b16 %v660, %v659
  %789 = vmatprep.subr.bf16.mxu0 0
  %790 = vmatpush1.bf16.msra.mxu0 %v661
  %791 = vmatprep.subr.bf16.mxu0 0
  %792 = vmatpush1.bf16.msra.mxu0 %v662
  %793 = vmatprep.subr.bf16.mxu0 0
  %794 = vmatpush1.bf16.msra.mxu0 %v663
  %795 = vmatprep.subr.bf16.mxu0 0
  %796 = vmatpush1.bf16.msra.mxu0 %v664
  %797 = vmatprep.subr.bf16.mxu0 0
  %798 = vmatpush1.bf16.msra.mxu0 %v665
  %799 = vmatprep.subr.bf16.mxu0 0
  %800 = vmatpush1.bf16.msra.mxu0 %v666
  %801 = vmatprep.subr.bf16.mxu0 0
  %802 = vmatpush1.bf16.msra.mxu0 %v667
  %803 = vmatprep.subr.bf16.mxu0 0
  %804 = vmatpush1.bf16.msra.mxu0 %v668
  %805 = vmatprep.subr.bf16.mxu0 0
  %806 = vmatpush1.bf16.msra.mxu0 %v669
  %807 = vmatprep.subr.bf16.mxu0 0
  %808 = vmatpush1.bf16.msra.mxu0 %v670
  %809 = vmatprep.subr.bf16.mxu0 0
  %810 = vmatpush1.bf16.msra.mxu0 %v671
  %811 = vmatprep.subr.bf16.mxu0 0
  %812 = vmatpush1.bf16.msra.mxu0 %v672
  %813 = vmatprep.subr.bf16.mxu0 0
  %814 = vmatpush1.bf16.msra.mxu0 %v673
  %815 = vmatprep.subr.bf16.mxu0 0
  %816 = vmatpush1.bf16.msra.mxu0 %v674
  %817 = vmatprep.subr.bf16.mxu0 0
  %818 = vmatpush1.bf16.msra.mxu0 %v675
  %819 = vmatprep.subr.bf16.mxu0 0
  %820 = vmatpush1.bf16.msra.mxu0 %v676
  %821 = vmatprep.mubr.bf16.mxu0 %v342
  %822 = vmatmul.mubr.bf16.gmra.mrb[0].mxu0 %v341
  %v823 = vpop.f32.mrb[0].mxu0
  %v824 = vadd.f32 %v208, %v823
  %v825 = vpop.f32.mrb[0].mxu0
  %v826 = vpop.f32.mrb[0].mxu0
  %v827 = vadd.f32 %v213, %v826
  %v828 = vpop.f32.mrb[0].mxu0
  %829 = vmatprep.mubr.bf16.mxu0 %v350
  %830 = vmatmul.mubr.bf16.gmra.mrb[0].mxu0 %v349
  %v831 = vpop.f32.mrb[0].mxu0
  %v832 = vadd.f32 %v218, %v831
  %v833 = vpop.f32.mrb[0].mxu0
  %v834 = vpop.f32.mrb[0].mxu0
  %v835 = vadd.f32 %v223, %v834
  %v836 = vpop.f32.mrb[0].mxu0
  %837 = vmatprep.mubr.bf16.mxu0 %v358
  %838 = vmatmul.mubr.bf16.gmra.mrb[0].mxu0 %v357
  %v839 = vpop.f32.mrb[0].mxu0
  %v840 = vadd.f32 %v228, %v839
  %v841 = vpop.f32.mrb[0].mxu0
  %v842 = vpop.f32.mrb[0].mxu0
  %v843 = vadd.f32 %v233, %v842
  %v844 = vpop.f32.mrb[0].mxu0
  %845 = vmatprep.mubr.bf16.mxu0 %v366
  %846 = vmatmul.mubr.bf16.gmra.mrb[0].mxu0 %v365
  %v847 = vpop.f32.mrb[0].mxu0
  %v848 = vadd.f32 %v238, %v847
  %v849 = vpop.f32.mrb[0].mxu0
  %v850 = vpop.f32.mrb[0].mxu0
  %v851 = vadd.f32 %v243, %v850
  %v852 = vpop.f32.mrb[0].mxu0
  %853 = vdwg.mxu0
  %854 = vmatprep.subr.bf16.mxu0 0
  %855 = vmatpush1.bf16.msra.mxu0 %v677
  %856 = vmatprep.subr.bf16.mxu0 0
  %857 = vmatpush1.bf16.msra.mxu0 %v678
  %858 = vmatprep.subr.bf16.mxu0 0
  %859 = vmatpush1.bf16.msra.mxu0 %v679
  %860 = vmatprep.subr.bf16.mxu0 0
  %861 = vmatpush1.bf16.msra.mxu0 %v680
  %862 = vmatprep.subr.bf16.mxu0 0
  %863 = vmatpush1.bf16.msra.mxu0 %v681
  %864 = vmatprep.subr.bf16.mxu0 0
  %865 = vmatpush1.bf16.msra.mxu0 %v682
  %866 = vmatprep.subr.bf16.mxu0 0
  %867 = vmatpush1.bf16.msra.mxu0 %v683
  %868 = vmatprep.subr.bf16.mxu0 0
  %869 = vmatpush1.bf16.msra.mxu0 %v684
  %870 = vmatprep.subr.bf16.mxu0 0
  %871 = vmatpush1.bf16.msra.mxu0 %v685
  %872 = vmatprep.subr.bf16.mxu0 0
  %873 = vmatpush1.bf16.msra.mxu0 %v686
  %874 = vmatprep.subr.bf16.mxu0 0
  %875 = vmatpush1.bf16.msra.mxu0 %v687
  %876 = vmatprep.subr.bf16.mxu0 0
  %877 = vmatpush1.bf16.msra.mxu0 %v688
  %878 = vmatprep.subr.bf16.mxu0 0
  %879 = vmatpush1.bf16.msra.mxu0 %v689
  %880 = vmatprep.subr.bf16.mxu0 0
  %881 = vmatpush1.bf16.msra.mxu0 %v690
  %882 = vmatprep.subr.bf16.mxu0 0
  %883 = vmatpush1.bf16.msra.mxu0 %v691
  %884 = vmatprep.subr.bf16.mxu0 0
  %885 = vmatpush1.bf16.msra.mxu0 %v692
  %886 = vmatprep.mubr.bf16.mxu0 %v344
  %887 = vmatmul.mubr.bf16.gmra.mrb[0].mxu0 %v343
  %v888 = vpop.f32.mrb[0].mxu0
  %v889 = vadd.f32 %v824, %v888
  %v890 = vpop.f32.mrb[0].mxu0
  %v891 = vpop.f32.mrb[0].mxu0
  %v892 = vadd.f32 %v827, %v891
  %v893 = vpop.f32.mrb[0].mxu0
  %894 = vmatprep.mubr.bf16.mxu0 %v352
  %895 = vmatmul.mubr.bf16.gmra.mrb[0].mxu0 %v351
  %v896 = vpop.f32.mrb[0].mxu0
  %v897 = vadd.f32 %v832, %v896
  %v898 = vpop.f32.mrb[0].mxu0
  %v899 = vpop.f32.mrb[0].mxu0
  %v900 = vadd.f32 %v835, %v899
  %v901 = vpop.f32.mrb[0].mxu0
  %902 = vmatprep.mubr.bf16.mxu0 %v360
  %903 = vmatmul.mubr.bf16.gmra.mrb[0].mxu0 %v359
  %v904 = vpop.f32.mrb[0].mxu0
  %v905 = vadd.f32 %v840, %v904
  %v906 = vpop.f32.mrb[0].mxu0
  %v907 = vpop.f32.mrb[0].mxu0
  %v908 = vadd.f32 %v843, %v907
  %v909 = vpop.f32.mrb[0].mxu0
  %910 = vmatprep.mubr.bf16.mxu0 %v368
  %911 = vmatmul.mubr.bf16.gmra.mrb[0].mxu0 %v367
  %v912 = vpop.f32.mrb[0].mxu0
  %v913 = vadd.f32 %v848, %v912
  %v914 = vpop.f32.mrb[0].mxu0
  %v915 = vpop.f32.mrb[0].mxu0
  %v916 = vadd.f32 %v851, %v915
  %v917 = vpop.f32.mrb[0].mxu0
  %918 = vdwg.mxu0
  %919 = vmatprep.subr.bf16.mxu0 0
  %920 = vmatpush1.bf16.msra.mxu0 %v693
  %921 = vmatprep.subr.bf16.mxu0 0
  %922 = vmatpush1.bf16.msra.mxu0 %v694
  %923 = vmatprep.subr.bf16.mxu0 0
  %924 = vmatpush1.bf16.msra.mxu0 %v695
  %925 = vmatprep.subr.bf16.mxu0 0
  %926 = vmatpush1.bf16.msra.mxu0 %v696
  %927 = vmatprep.subr.bf16.mxu0 0
  %928 = vmatpush1.bf16.msra.mxu0 %v697
  %929 = vmatprep.subr.bf16.mxu0 0
  %930 = vmatpush1.bf16.msra.mxu0 %v698
  %931 = vmatprep.subr.bf16.mxu0 0
  %932 = vmatpush1.bf16.msra.mxu0 %v699
  %933 = vmatprep.subr.bf16.mxu0 0
  %934 = vmatpush1.bf16.msra.mxu0 %v700
  %935 = vmatprep.subr.bf16.mxu0 0
  %936 = vmatpush1.bf16.msra.mxu0 %v701
  %937 = vmatprep.subr.bf16.mxu0 0
  %938 = vmatpush1.bf16.msra.mxu0 %v702
  %939 = vmatprep.subr.bf16.mxu0 0
  %940 = vmatpush1.bf16.msra.mxu0 %v703
  %941 = vmatprep.subr.bf16.mxu0 0
  %942 = vmatpush1.bf16.msra.mxu0 %v704
  %943 = vmatprep.subr.bf16.mxu0 0
  %944 = vmatpush1.bf16.msra.mxu0 %v705
  %945 = vmatprep.subr.bf16.mxu0 0
  %946 = vmatpush1.bf16.msra.mxu0 %v706
  %947 = vmatprep.subr.bf16.mxu0 0
  %948 = vmatpush1.bf16.msra.mxu0 %v707
  %949 = vmatprep.subr.bf16.mxu0 0
  %950 = vmatpush1.bf16.msra.mxu0 %v708
  %951 = vmatprep.mubr.bf16.mxu0 %v346
  %952 = vmatmul.mubr.bf16.gmra.mrb[0].mxu0 %v345
  %v953 = vpop.f32.mrb[0].mxu0
  %v954 = vadd.f32 %v889, %v953
  %v955 = vpop.f32.mrb[0].mxu0
  %v956 = vpop.f32.mrb[0].mxu0
  %v957 = vadd.f32 %v892, %v956
  %v958 = vpop.f32.mrb[0].mxu0
  %959 = vmatprep.mubr.bf16.mxu0 %v354
  %960 = vmatmul.mubr.bf16.gmra.mrb[0].mxu0 %v353
  %v961 = vpop.f32.mrb[0].mxu0
  %v962 = vadd.f32 %v897, %v961
  %v963 = vpop.f32.mrb[0].mxu0
  %v964 = vpop.f32.mrb[0].mxu0
  %v965 = vadd.f32 %v900, %v964
  %v966 = vpop.f32.mrb[0].mxu0
  %967 = vmatprep.mubr.bf16.mxu0 %v362
  %968 = vmatmul.mubr.bf16.gmra.mrb[0].mxu0 %v361
  %v969 = vpop.f32.mrb[0].mxu0
  %v970 = vadd.f32 %v905, %v969
  %v971 = vpop.f32.mrb[0].mxu0
  %v972 = vpop.f32.mrb[0].mxu0
  %v973 = vadd.f32 %v908, %v972
  %v974 = vpop.f32.mrb[0].mxu0
  %975 = vmatprep.mubr.bf16.mxu0 %v370
  %976 = vmatmul.mubr.bf16.gmra.mrb[0].mxu0 %v369
  %v977 = vpop.f32.mrb[0].mxu0
  %v978 = vadd.f32 %v913, %v977
  %v979 = vpop.f32.mrb[0].mxu0
  %v980 = vpop.f32.mrb[0].mxu0
  %v981 = vadd.f32 %v916, %v980
  %v982 = vpop.f32.mrb[0].mxu0
  %983 = vdwg.mxu0
  %984 = vmatprep.subr.bf16.mxu0 0
  %985 = vmatpush1.bf16.msra.mxu0 %v709
  %986 = vmatprep.subr.bf16.mxu0 0
  %987 = vmatpush1.bf16.msra.mxu0 %v710
  %988 = vmatprep.subr.bf16.mxu0 0
  %989 = vmatpush1.bf16.msra.mxu0 %v711
  %990 = vmatprep.subr.bf16.mxu0 0
  %991 = vmatpush1.bf16.msra.mxu0 %v712
  %992 = vmatprep.subr.bf16.mxu0 0
  %993 = vmatpush1.bf16.msra.mxu0 %v713
  %994 = vmatprep.subr.bf16.mxu0 0
  %995 = vmatpush1.bf16.msra.mxu0 %v714
  %996 = vmatprep.subr.bf16.mxu0 0
  %997 = vmatpush1.bf16.msra.mxu0 %v715
  %998 = vmatprep.subr.bf16.mxu0 0
  %999 = vmatpush1.bf16.msra.mxu0 %v716
  %1000 = vmatprep.subr.bf16.mxu0 0
  %1001 = vmatpush1.bf16.msra.mxu0 %v717
  %1002 = vmatprep.subr.bf16.mxu0 0
  %1003 = vmatpush1.bf16.msra.mxu0 %v718
  %1004 = vmatprep.subr.bf16.mxu0 0
  %1005 = vmatpush1.bf16.msra.mxu0 %v719
  %1006 = vmatprep.subr.bf16.mxu0 0
  %1007 = vmatpush1.bf16.msra.mxu0 %v720
  %1008 = vmatprep.subr.bf16.mxu0 0
  %1009 = vmatpush1.bf16.msra.mxu0 %v721
  %1010 = vmatprep.subr.bf16.mxu0 0
  %1011 = vmatpush1.bf16.msra.mxu0 %v722
  %1012 = vmatprep.subr.bf16.mxu0 0
  %1013 = vmatpush1.bf16.msra.mxu0 %v723
  %1014 = vmatprep.subr.bf16.mxu0 0
  %1015 = vmatpush1.bf16.msra.mxu0 %v724
  %1016 = vmatprep.mubr.bf16.mxu0 %v348
  %1017 = vmatmul.mubr.bf16.gmra.mrb[0].mxu0 %v347
  %v1018 = vpop.f32.mrb[0].mxu0
  %v1019 = vadd.f32 %v954, %v1018
  %v1020 = vpop.f32.mrb[0].mxu0
  %v1021 = vpop.f32.mrb[0].mxu0
  %v1022 = vadd.f32 %v957, %v1021
  %v1023 = vpop.f32.mrb[0].mxu0
  %1024 = vmatprep.mubr.bf16.mxu0 %v356
  %1025 = vmatmul.mubr.bf16.gmra.mrb[0].mxu0 %v355
  %v1026 = vpop.f32.mrb[0].mxu0
  %v1027 = vadd.f32 %v962, %v1026
  %v1028 = vpop.f32.mrb[0].mxu0
  %v1029 = vpop.f32.mrb[0].mxu0
  %v1030 = vadd.f32 %v965, %v1029
  %v1031 = vpop.f32.mrb[0].mxu0
  %1032 = vmatprep.mubr.bf16.mxu0 %v364
  %1033 = vmatmul.mubr.bf16.gmra.mrb[0].mxu0 %v363
  %v1034 = vpop.f32.mrb[0].mxu0
  %v1035 = vadd.f32 %v970, %v1034
  %v1036 = vpop.f32.mrb[0].mxu0
  %v1037 = vpop.f32.mrb[0].mxu0
  %v1038 = vadd.f32 %v973, %v1037
  %v1039 = vpop.f32.mrb[0].mxu0
  %1040 = vmatprep.mubr.bf16.mxu0 %v372
  %1041 = vmatmul.mubr.bf16.gmra.mrb[0].mxu0 %v371
  %v1042 = vpop.f32.mrb[0].mxu0
  %v1043 = vadd.f32 %v978, %v1042
  %v1044 = vpop.f32.mrb[0].mxu0
  %v1045 = vpop.f32.mrb[0].mxu0
  %v1046 = vadd.f32 %v981, %v1045
  %v1047 = vpop.f32.mrb[0].mxu0
  %1048 = vdwg.mxu0
  %vm1049 = vcmp.ge.f32.partialorder %v1019, 0.0
  %vm1050 = vcmp.ge.f32.partialorder %v1022, 0.0
  %vm1051 = vcmp.ge.f32.partialorder %v1027, 0.0
  %vm1052 = vcmp.ge.f32.partialorder %v1030, 0.0
  %vm1053 = vcmp.ge.f32.partialorder %v1035, 0.0
  %vm1054 = vcmp.ge.f32.partialorder %v1038, 0.0
  %vm1055 = vcmp.ge.f32.partialorder %v1043, 0.0
  %vm1056 = vcmp.ge.f32.partialorder %v1046, 0.0
  %v1057 = vmul.f32 %v1019, 0.01
  %v1058 = vmul.f32 %v1022, 0.01
  %v1059 = vmul.f32 %v1027, 0.01
  %v1060 = vmul.f32 %v1030, 0.01
  %v1061 = vmul.f32 %v1035, 0.01
  %v1062 = vmul.f32 %v1038, 0.01
  %v1063 = vmul.f32 %v1043, 0.01
  %v1064 = vmul.f32 %v1046, 0.01
  %v1065 = vsel %vm1049, %v1019, %v1057
  %v1066 = vsel %vm1050, %v1022, %v1058
  %v1067 = vsel %vm1051, %v1027, %v1059
  %v1068 = vsel %vm1052, %v1030, %v1060
  %v1069 = vsel %vm1053, %v1035, %v1061
  %v1070 = vsel %vm1054, %v1038, %v1062
  %v1071 = vsel %vm1055, %v1043, %v1063
  %v1072 = vsel %vm1056, %v1046, %v1064
  %v1073 = vld [vmem:[%s3] sm:$0xff]
  %v1074 = vld [vmem:[%s3 + $0x8] sm:$0xff]
  %v1075 = vld [vmem:[%s3 + $0x10] sm:$0xff]
  %v1076 = vld [vmem:[%s3 + $0x18] sm:$0xff]
  %v1077 = vld [vmem:[%s3 + $0x20] sm:$0xff]
  %v1078 = vld [vmem:[%s3 + $0x28] sm:$0xff]
  %v1079 = vld [vmem:[%s3 + $0x30] sm:$0xff]
  %v1080 = vld [vmem:[%s3 + $0x38] sm:$0xff]
  %v1081 = vmul.f32 %v1065, %v1073
  %v1082 = vmul.f32 %v1066, %v1074
  %v1083 = vmul.f32 %v1067, %v1075
  %v1084 = vmul.f32 %v1068, %v1076
  %v1085 = vmul.f32 %v1069, %v1077
  %v1086 = vmul.f32 %v1070, %v1078
  %v1087 = vmul.f32 %v1071, %v1079
  %v1088 = vmul.f32 %v1072, %v1080
  %v1089 = vld [vmem:[%s6] sm:$0xf]
  %v1090 = vld [vmem:[%s6 + $0x4] sm:$0xf]
  %v1091 = vld [vmem:[%s6 + $0x8] sm:$0xf]
  %v1092 = vld [vmem:[%s6 + $0xc] sm:$0xf]
  %v1093 = vld [vmem:[%s6 + $0x10] sm:$0xf]
  %v1094 = vld [vmem:[%s6 + $0x14] sm:$0xf]
  %v1095 = vld [vmem:[%s6 + $0x18] sm:$0xf]
  %v1096 = vld [vmem:[%s6 + $0x1c] sm:$0xf]
  %v1097 = vpack.c.bf16 %v1082, %v1081
  %v1098 = vpack.c.bf16 %v1084, %v1083
  %v1099 = vpack.c.bf16 %v1086, %v1085
  %v1100 = vpack.c.bf16 %v1088, %v1087
  %v1101 = vld [vmem:[%s5] sm:$0xf]
  %v1102 = vld [vmem:[%s5 + $0x4] sm:$0xf]
  %v1103 = vld [vmem:[%s5 + $0x8] sm:$0xf]
  %v1104 = vld [vmem:[%s5 + $0xc] sm:$0xf]
  %v1105 = vld [vmem:[%s5 + $0x10] sm:$0xf]
  %v1106 = vld [vmem:[%s5 + $0x14] sm:$0xf]
  %v1107 = vld [vmem:[%s5 + $0x18] sm:$0xf]
  %v1108 = vld [vmem:[%s5 + $0x1c] sm:$0xf]
  %v1109 = vld [vmem:[%s4] sm:$0xf]
  %v1110 = vld [vmem:[%s4 + $0x4] sm:$0xf]
  %v1111 = vld [vmem:[%s4 + $0x8] sm:$0xf]
  %v1112 = vld [vmem:[%s4 + $0xc] sm:$0xf]
  %v1113 = vld [vmem:[%s4 + $0x10] sm:$0xf]
  %v1114 = vld [vmem:[%s4 + $0x14] sm:$0xf]
  %v1115 = vld [vmem:[%s4 + $0x18] sm:$0xf]
  %v1116 = vld [vmem:[%s4 + $0x1c] sm:$0xf]
  %v1125 = vunpack.c.l.b16 %v1101
  %v1126 = vunpack.c.l.b16 %v1102
  %v1127 = vunpack.c.l.b16 %v1103
  %v1128 = vunpack.c.l.b16 %v1104
  %v1129 = vunpack.c.l.b16 %v1105
  %v1130 = vunpack.c.l.b16 %v1106
  %v1131 = vunpack.c.l.b16 %v1107
  %v1132 = vunpack.c.l.b16 %v1108
  %v1133 = vpack.c.b16 %v1126, %v1125
  %v1134 = vpack.c.b16 %v1128, %v1127
  %v1135 = vpack.c.b16 %v1130, %v1129
  %v1136 = vpack.c.b16 %v1132, %v1131
  %v1145 = vunpack.c.l.b16 %v1109
  %v1146 = vunpack.c.l.b16 %v1110
  %v1147 = vunpack.c.l.b16 %v1111
  %v1148 = vunpack.c.l.b16 %v1112
  %v1149 = vunpack.c.l.b16 %v1113
  %v1150 = vunpack.c.l.b16 %v1114
  %v1151 = vunpack.c.l.b16 %v1115
  %v1152 = vunpack.c.l.b16 %v1116
  %v1153 = vpack.c.b16 %v1146, %v1145
  %v1154 = vpack.c.b16 %v1148, %v1147
  %v1155 = vpack.c.b16 %v1150, %v1149
  %v1156 = vpack.c.b16 %v1152, %v1151
  %vm1161 = vcmask 523264
  %v1163 = vsel %vm1161, %v1133, 0
  %v1166 = vsel %vm1161, %v1134, 0
  %v1169 = vsel %vm1161, %v1135, 0
  %v1172 = vsel %vm1161, %v1136, 0
  %1174 = vmatprep.subr.bf16.mxu0 0
  %1175 = vmatpush1.bf16.msra.mxu0 %v1153
  %1176 = vmatprep.subr.bf16.mxu0 0
  %1177 = vmatpush1.bf16.msra.mxu0 %v1154
  %1178 = vmatprep.subr.bf16.mxu0 0
  %1179 = vmatpush1.bf16.msra.mxu0 %v1155
  %1180 = vmatprep.subr.bf16.mxu0 0
  %1181 = vmatpush1.bf16.msra.mxu0 %v1156
  %1182 = vmatprep.subr.bf16.mxu0 0
  %1183 = vmatpush1.bf16.msra.mxu0 0
  %1184 = vmatprep.subr.bf16.mxu0 0
  %1185 = vmatpush1.bf16.msra.mxu0 0
  %1186 = vmatprep.subr.bf16.mxu0 0
  %1187 = vmatpush1.bf16.msra.mxu0 0
  %1188 = vmatprep.subr.bf16.mxu0 0
  %1189 = vmatpush1.bf16.msra.mxu0 0
  %1190 = vmatprep.subr.bf16.mxu0 0
  %1191 = vmatpush1.bf16.msra.mxu0 0
  %1192 = vmatprep.subr.bf16.mxu0 0
  %1193 = vmatpush1.bf16.msra.mxu0 0
  %1194 = vmatprep.subr.bf16.mxu0 0
  %1195 = vmatpush1.bf16.msra.mxu0 0
  %1196 = vmatprep.subr.bf16.mxu0 0
  %1197 = vmatpush1.bf16.msra.mxu0 0
  %1198 = vmatprep.subr.bf16.mxu0 0
  %1199 = vmatpush1.bf16.msra.mxu0 0
  %1200 = vmatprep.subr.bf16.mxu0 0
  %1201 = vmatpush1.bf16.msra.mxu0 0
  %1202 = vmatprep.subr.bf16.mxu0 0
  %1203 = vmatpush1.bf16.msra.mxu0 0
  %1204 = vmatprep.subr.bf16.mxu0 0
  %1205 = vmatpush1.bf16.msra.mxu0 0
  %1206 = vmatprep.mubr.bf16.mxu0 0
  %1207 = vmatmul.mubr.bf16.gmra.mrb[0].mxu0 %v1163
  %v1208 = vpop.f32.mrb[0].mxu0
  %v1209 = vadd.f32 0.0, %v1208
  %v1210 = vpop.f32.mrb[0].mxu0
  %v1211 = vpop.f32.mrb[0].mxu0
  %v1212 = vadd.f32 0.0, %v1211
  %v1213 = vpop.f32.mrb[0].mxu0
  %1214 = vmatprep.mubr.bf16.mxu0 0
  %1215 = vmatmul.mubr.bf16.gmra.mrb[0].mxu0 %v1166
  %v1216 = vpop.f32.mrb[0].mxu0
  %v1217 = vadd.f32 0.0, %v1216
  %v1218 = vpop.f32.mrb[0].mxu0
  %v1219 = vpop.f32.mrb[0].mxu0
  %v1220 = vadd.f32 0.0, %v1219
  %v1221 = vpop.f32.mrb[0].mxu0
  %1222 = vmatprep.mubr.bf16.mxu0 0
  %1223 = vmatmul.mubr.bf16.gmra.mrb[0].mxu0 %v1169
  %v1224 = vpop.f32.mrb[0].mxu0
  %v1225 = vadd.f32 0.0, %v1224
  %v1226 = vpop.f32.mrb[0].mxu0
  %v1227 = vpop.f32.mrb[0].mxu0
  %v1228 = vadd.f32 0.0, %v1227
  %v1229 = vpop.f32.mrb[0].mxu0
  %1230 = vmatprep.mubr.bf16.mxu0 0
  %1231 = vmatmul.mubr.bf16.gmra.mrb[0].mxu0 %v1172
  %v1232 = vpop.f32.mrb[0].mxu0
  %v1233 = vadd.f32 0.0, %v1232
  %v1234 = vpop.f32.mrb[0].mxu0
  %v1235 = vpop.f32.mrb[0].mxu0
  %v1236 = vadd.f32 0.0, %v1235
  %v1237 = vpop.f32.mrb[0].mxu0
  %1238 = vdwg.mxu0
  %v1247 = vunpack.c.l.b16 %v1089
  %v1248 = vunpack.c.l.b16 %v1090
  %v1249 = vunpack.c.l.b16 %v1091
  %v1250 = vunpack.c.l.b16 %v1092
  %v1251 = vunpack.c.l.b16 %v1093
  %v1252 = vunpack.c.l.b16 %v1094
  %v1253 = vunpack.c.l.b16 %v1095
  %v1254 = vunpack.c.l.b16 %v1096
  %v1255 = vpack.c.b16 %v1248, %v1247
  %v1256 = vpack.c.b16 %v1250, %v1249
  %v1257 = vpack.c.b16 %v1252, %v1251
  %v1258 = vpack.c.b16 %v1254, %v1253
  %v1260 = vsel %vm1161, %v1255, 0
  %v1263 = vsel %vm1161, %v1256, 0
  %v1266 = vsel %vm1161, %v1257, 0
  %v1269 = vsel %vm1161, %v1258, 0
  %1271 = vmatprep.subr.bf16.mxu0 0
  %1272 = vmatpush1.bf16.msra.mxu0 %v1097
  %1273 = vmatprep.subr.bf16.mxu0 0
  %1274 = vmatpush1.bf16.msra.mxu0 %v1098
  %1275 = vmatprep.subr.bf16.mxu0 0
  %1276 = vmatpush1.bf16.msra.mxu0 %v1099
  %1277 = vmatprep.subr.bf16.mxu0 0
  %1278 = vmatpush1.bf16.msra.mxu0 %v1100
  %1279 = vmatprep.subr.bf16.mxu0 0
  %1280 = vmatpush1.bf16.msra.mxu0 0
  %1281 = vmatprep.subr.bf16.mxu0 0
  %1282 = vmatpush1.bf16.msra.mxu0 0
  %1283 = vmatprep.subr.bf16.mxu0 0
  %1284 = vmatpush1.bf16.msra.mxu0 0
  %1285 = vmatprep.subr.bf16.mxu0 0
  %1286 = vmatpush1.bf16.msra.mxu0 0
  %1287 = vmatprep.subr.bf16.mxu0 0
  %1288 = vmatpush1.bf16.msra.mxu0 0
  %1289 = vmatprep.subr.bf16.mxu0 0
  %1290 = vmatpush1.bf16.msra.mxu0 0
  %1291 = vmatprep.subr.bf16.mxu0 0
  %1292 = vmatpush1.bf16.msra.mxu0 0
  %1293 = vmatprep.subr.bf16.mxu0 0
  %1294 = vmatpush1.bf16.msra.mxu0 0
  %1295 = vmatprep.subr.bf16.mxu0 0
  %1296 = vmatpush1.bf16.msra.mxu0 0
  %1297 = vmatprep.subr.bf16.mxu0 0
  %1298 = vmatpush1.bf16.msra.mxu0 0
  %1299 = vmatprep.subr.bf16.mxu0 0
  %1300 = vmatpush1.bf16.msra.mxu0 0
  %1301 = vmatprep.subr.bf16.mxu0 0
  %1302 = vmatpush1.bf16.msra.mxu0 0
  %1303 = vmatprep.mubr.bf16.mxu0 0
  %1304 = vmatmul.mubr.bf16.gmra.mrb[0].mxu0 %v1260
  %v1305 = vpop.f32.mrb[0].mxu0
  %v1306 = vadd.f32 %v1209, %v1305
  %v1307 = vpop.f32.mrb[0].mxu0
  %v1308 = vpop.f32.mrb[0].mxu0
  %v1309 = vadd.f32 %v1212, %v1308
  %v1310 = vpop.f32.mrb[0].mxu0
  %1311 = vmatprep.mubr.bf16.mxu0 0
  %1312 = vmatmul.mubr.bf16.gmra.mrb[0].mxu0 %v1263
  %v1313 = vpop.f32.mrb[0].mxu0
  %v1314 = vadd.f32 %v1217, %v1313
  %v1315 = vpop.f32.mrb[0].mxu0
  %v1316 = vpop.f32.mrb[0].mxu0
  %v1317 = vadd.f32 %v1220, %v1316
  %v1318 = vpop.f32.mrb[0].mxu0
  %1319 = vmatprep.mubr.bf16.mxu0 0
  %1320 = vmatmul.mubr.bf16.gmra.mrb[0].mxu0 %v1266
  %v1321 = vpop.f32.mrb[0].mxu0
  %v1322 = vadd.f32 %v1225, %v1321
  %v1323 = vpop.f32.mrb[0].mxu0
  %v1324 = vpop.f32.mrb[0].mxu0
  %v1325 = vadd.f32 %v1228, %v1324
  %v1326 = vpop.f32.mrb[0].mxu0
  %1327 = vmatprep.mubr.bf16.mxu0 0
  %1328 = vmatmul.mubr.bf16.gmra.mrb[0].mxu0 %v1269
  %v1329 = vpop.f32.mrb[0].mxu0
  %v1330 = vadd.f32 %v1233, %v1329
  %v1331 = vpop.f32.mrb[0].mxu0
  %v1332 = vpop.f32.mrb[0].mxu0
  %v1333 = vadd.f32 %v1236, %v1332
  %v1334 = vpop.f32.mrb[0].mxu0
  %1335 = vdwg.mxu0
  %v1336 = vld [vmem:[%s7] sm:$0xff]
  %v1337 = vld [vmem:[%s7 + $0x8] sm:$0xff]
  %v1338 = vld [vmem:[%s7 + $0x10] sm:$0xff]
  %v1339 = vld [vmem:[%s7 + $0x18] sm:$0xff]
  %v1340 = vld [vmem:[%s7 + $0x20] sm:$0xff]
  %v1341 = vld [vmem:[%s7 + $0x28] sm:$0xff]
  %v1342 = vld [vmem:[%s7 + $0x30] sm:$0xff]
  %v1343 = vld [vmem:[%s7 + $0x38] sm:$0xff]
  %1345 = vset.pattern.permute.xlu0 0
  %1346 = vperm.xlu0 %1345, %v1336
  %v1347 = vpop.permute.xlu0 %1346
  %1350 = vset.pattern.permute.xlu0 0
  %1351 = vperm.xlu0 %1350, %v1337
  %v1352 = vpop.permute.xlu0 %1351
  %1355 = vset.pattern.permute.xlu0 0
  %1356 = vperm.xlu0 %1355, %v1338
  %v1357 = vpop.permute.xlu0 %1356
  %1360 = vset.pattern.permute.xlu0 0
  %1361 = vperm.xlu0 %1360, %v1339
  %v1362 = vpop.permute.xlu0 %1361
  %1365 = vset.pattern.permute.xlu0 0
  %1366 = vperm.xlu0 %1365, %v1340
  %v1367 = vpop.permute.xlu0 %1366
  %1370 = vset.pattern.permute.xlu0 0
  %1371 = vperm.xlu0 %1370, %v1341
  %v1372 = vpop.permute.xlu0 %1371
  %1375 = vset.pattern.permute.xlu0 0
  %1376 = vperm.xlu0 %1375, %v1342
  %v1377 = vpop.permute.xlu0 %1376
  %1380 = vset.pattern.permute.xlu0 0
  %1381 = vperm.xlu0 %1380, %v1343
  %v1382 = vpop.permute.xlu0 %1381
  %v1384 = vadd.f32 %v1306, %v1347
  %v1385 = vadd.f32 %v1309, %v1352
  %v1386 = vadd.f32 %v1314, %v1357
  %v1387 = vadd.f32 %v1317, %v1362
  %v1388 = vadd.f32 %v1322, %v1367
  %v1389 = vadd.f32 %v1325, %v1372
  %v1390 = vadd.f32 %v1330, %v1377
  %v1391 = vadd.f32 %v1333, %v1382
  %vm1392 = vcmp.ge.f32.partialorder %v1384, 0.0
  %vm1393 = vcmp.ge.f32.partialorder %v1385, 0.0
  %vm1394 = vcmp.ge.f32.partialorder %v1386, 0.0
  %vm1395 = vcmp.ge.f32.partialorder %v1387, 0.0
  %vm1396 = vcmp.ge.f32.partialorder %v1388, 0.0
  %vm1397 = vcmp.ge.f32.partialorder %v1389, 0.0
  %vm1398 = vcmp.ge.f32.partialorder %v1390, 0.0
  %vm1399 = vcmp.ge.f32.partialorder %v1391, 0.0
  %v1400 = vmul.f32 %v1384, 0.01
  %v1401 = vmul.f32 %v1385, 0.01
  %v1402 = vmul.f32 %v1386, 0.01
  %v1403 = vmul.f32 %v1387, 0.01
  %v1404 = vmul.f32 %v1388, 0.01
  %v1405 = vmul.f32 %v1389, 0.01
  %v1406 = vmul.f32 %v1390, 0.01
  %v1407 = vmul.f32 %v1391, 0.01
  %v1408 = vsel %vm1392, %v1384, %v1400
  %v1409 = vsel %vm1393, %v1385, %v1401
  %v1410 = vsel %vm1394, %v1386, %v1402
  %v1411 = vsel %vm1395, %v1387, %v1403
  %v1412 = vsel %vm1396, %v1388, %v1404
  %v1413 = vsel %vm1397, %v1389, %v1405
  %v1414 = vsel %vm1398, %v1390, %v1406
  %v1415 = vsel %vm1399, %v1391, %v1407
  %v1416 = vld [vmem:[%s8] sm:$0xff]
  %v1417 = vld [vmem:[%s8 + $0x8] sm:$0xff]
  %v1418 = vld [vmem:[%s8 + $0x10] sm:$0xff]
  %v1419 = vld [vmem:[%s8 + $0x18] sm:$0xff]
  %v1420 = vld [vmem:[%s8 + $0x20] sm:$0xff]
  %v1421 = vld [vmem:[%s8 + $0x28] sm:$0xff]
  %v1422 = vld [vmem:[%s8 + $0x30] sm:$0xff]
  %v1423 = vld [vmem:[%s8 + $0x38] sm:$0xff]
  %1425 = vset.pattern.permute.xlu0 0
  %1426 = vperm.xlu0 %1425, %v1416
  %v1427 = vpop.permute.xlu0 %1426
  %1430 = vset.pattern.permute.xlu0 0
  %1431 = vperm.xlu0 %1430, %v1417
  %v1432 = vpop.permute.xlu0 %1431
  %1435 = vset.pattern.permute.xlu0 0
  %1436 = vperm.xlu0 %1435, %v1418
  %v1437 = vpop.permute.xlu0 %1436
  %1440 = vset.pattern.permute.xlu0 0
  %1441 = vperm.xlu0 %1440, %v1419
  %v1442 = vpop.permute.xlu0 %1441
  %1445 = vset.pattern.permute.xlu0 0
  %1446 = vperm.xlu0 %1445, %v1420
  %v1447 = vpop.permute.xlu0 %1446
  %1450 = vset.pattern.permute.xlu0 0
  %1451 = vperm.xlu0 %1450, %v1421
  %v1452 = vpop.permute.xlu0 %1451
  %1455 = vset.pattern.permute.xlu0 0
  %1456 = vperm.xlu0 %1455, %v1422
  %v1457 = vpop.permute.xlu0 %1456
  %1460 = vset.pattern.permute.xlu0 0
  %1461 = vperm.xlu0 %1460, %v1423
  %v1462 = vpop.permute.xlu0 %1461
  %v1464 = vmul.f32 %v1408, %v1427
  %v1465 = vmul.f32 %v1409, %v1432
  %v1466 = vmul.f32 %v1410, %v1437
  %v1467 = vmul.f32 %v1411, %v1442
  %v1468 = vmul.f32 %v1412, %v1447
  %v1469 = vmul.f32 %v1413, %v1452
  %v1470 = vmul.f32 %v1414, %v1457
  %v1471 = vmul.f32 %v1415, %v1462
  %v1472 = vadd.f32 %v1464, %v1465
  %v1473 = vadd.f32 %v1472, %v1466
  %v1474 = vadd.f32 %v1473, %v1467
  %v1475 = vadd.f32 %v1474, %v1468
  %v1476 = vadd.f32 %v1475, %v1469
  %v1477 = vadd.f32 %v1476, %v1470
  %v1478 = vadd.f32 %v1477, %v1471
  %v1479 = vrot.slane %v1478, 4
  %v1480 = vadd.f32 %v1478, %v1479
  %v1481 = vrot.slane %v1480, 2
  %v1482 = vadd.f32 %v1480, %v1481
  %v1483 = vrot.slane %v1482, 1
  %v1484 = vadd.f32 %v1482, %v1483
  %s1485 = sld [smem:[#allocation2]]
  %v1486 = vstv %s1485
  %v1487 = vadd.f32 %v1484, %v1486
  %v1488 = vxor.u32 %v1487, 2147483648
  %v1489 = vmul.f32 %v1488, 1.442695
  %v1490 = vpow.pop %v1489
  %v1491 = vadd.f32 %v1490, 1.0
  %v1492 = vrcp.pop %v1491
  %v1493 = vmul.f32 1.0, %v1492
  %1494 = vst [vmem:[%s10] sm:$0x1] %v1493
  // Predicated region
  $region42: #{discriminator_forward.1} parent=0 // pred_check
    _
  $region43: #{discriminator_forward.1} parent=0 // pred_check_branch
    %1496 = sbr.rel (0) target = $region45
  $region44: #{discriminator_forward.1} parent=0 // pred_region
    _
  $region45: #{discriminator_forward.1} parent=0 // pred_fallthru
    _
  // Predicated region
  $region46: #{discriminator_forward.1} parent=0 // pred_check
    _
  $region47: #{discriminator_forward.1} parent=0 // pred_check_branch
    %1498 = sbr.rel (0) target = $region49
  $region48: #{discriminator_forward.1} parent=0 // pred_region
    _
  $region49: #{discriminator_forward.1} parent=0 // pred_fallthru
    _

</llo_original>
